<compile_context>
chip_gen: v5e
topology: v5e:2x2
jax: 0.10.0
libtpu: 0.0.40
codegen_flags: <defaults>
</compile_context>

<pallas_src>
import functools
import math

import jax
import jax.numpy as jnp
from jax.experimental import pallas as pl
from jax.experimental.pallas import tpu as pltpu


# ----------------------------------------------------------------- fused GEMM(+bias) kernels
def _gemm_bias_kernel(w_ref, x_ref, b_ref, o_ref):
    """Single-K-step path: one MXU dot, bias fused into the store epilogue."""
    o_ref[0] = jnp.dot(w_ref[...], x_ref[0],
                       preferred_element_type=jnp.float32) + b_ref[...]


def _gemm_bias_acc_kernel(w_ref, x_ref, b_ref, o_ref):
    """Multi-K-step path: accumulate straight into the resident f32 output block."""

    @pl.when(pl.program_id(2) == 0)
    def _():
        o_ref[0] = jnp.broadcast_to(b_ref[...], o_ref.shape[1:])

    o_ref[0] += jnp.dot(w_ref[...], x_ref[0], preferred_element_type=jnp.float32)


# -------------------------------------------------------------------------- tiling helpers
def _round_up(x, m):
    return ((x + m - 1) // m) * m


def _largest_divisor(n, cap, multiple):
    """Largest d <= cap with d % multiple == 0 and n % d == 0, else None."""
    best, d, cap = None, multiple, min(cap, n)
    while d <= cap:
        if n % d == 0:
            best = d
        d += multiple
    return best


def conv3d_gemm(w2_bf16, patches_bf16, bias_f32):
    """out[n] = w2 (Cout,K) @ patches[n] (K,M) + bias (Cout,1); f32 accumulation.

    w2_bf16     : (Cout, K)   bf16
    patches_bf16: (N, K, M)   bf16   (im2col, transposed orientation)
    bias_f32    : (Cout, 1)   f32
    returns     : (N, Cout, M) f32
    """
    Cout, K = w2_bf16.shape
    Nb, K2, M = patches_bf16.shape
    assert K == K2 and bias_f32.shape == (Cout, 1)

    # ---- K tiling: single reduction step whenever the weight block stays small -----------
    if K <= 4096 and Cout * K * 2 <= 4 * 1024 * 1024:
        tk, Kp = K, K
    else:
        tk = _largest_divisor(K, 1024, 128)        # weight block last dim needs 128-align
        if tk is None:
            tk, Kp = 1024, _round_up(K, 1024)      # rare: pad K (zero rows/cols, exact)
        else:
            Kp = K

    # ---- M tiling: big, lane-dense, dividing M exactly in the common case ---------------
    tm = _largest_divisor(M, 1024, 128)
    if tm is None:
        tm, Mp = (M, M) if M <= 1024 else (512, _round_up(M, 512))
    else:
        Mp = M

    def _buf_bytes(tm_):
        # double-buffered activation + output blocks, resident weight + bias
        return (2 * tk * tm_ * 2) + (2 * Cout * tm_ * 4) + (2 * Cout * tk * 2) + Cout * 8

    # Shrink tm only while it stays a 128-multiple >= 256: (a) VMEM budget that fits every
    # generation's scoped default, (b) >= 4 parallel programs for v7x's two TensorCores.
    while tm > 256 and tm % 256 == 0 and (
            _buf_bytes(tm) > 12 * 1024 * 1024 or Nb * (Mp // tm) < 4):
        tm //= 2

    # Rare fallback padding only (typical shapes divide exactly -> no extra HBM pass).
    if Kp != K:
        w2_bf16 = jnp.pad(w2_bf16, ((0, 0), (0, Kp - K)))
        patches_bf16 = jnp.pad(patches_bf16, ((0, 0), (0, Kp - K), (0, 0)))
    if Mp != M:
        patches_bf16 = jnp.pad(patches_bf16, ((0, 0), (0, 0), (0, Mp - M)))

    gm, gk = Mp // tm, Kp // tk
    kernel = _gemm_bias_kernel if gk == 1 else _gemm_bias_acc_kernel

    out = pl.pallas_call(
        kernel,
        out_shape=jax.ShapeDtypeStruct((Nb, Cout, Mp), jnp.float32),
        grid_spec=pltpu.PrefetchScalarGridSpec(
            num_scalar_prefetch=0,
            grid=(Nb, gm, gk),
            in_specs=[
                pl.BlockSpec((Cout, tk), lambda n, m, k: (0, k)),      # weights (resident)
                pl.BlockSpec((1, tk, tm), lambda n, m, k: (n, k, m)),  # patches (streamed 1x)
                pl.BlockSpec((Cout, 1), lambda n, m, k: (0, 0)),       # bias (resident)
            ],
            out_specs=pl.BlockSpec((1, Cout, tm), lambda n, m, k: (n, 0, m)),
        ),
        compiler_params=pltpu.CompilerParams(
            dimension_semantics=("parallel", "parallel", "arbitrary"),
            vmem_limit_bytes=32 * 1024 * 1024,
        ),
    )(w2_bf16, patches_bf16, bias_f32)

    if Mp != M:
        out = out[:, :, :M]
    return out


# --------------------------------------------------------------------------------- conv3d
def single_conv3d_block(x_ncdhw, weight, bias, kernel_size):
    """Forward of SingleConv3DBlock: Conv3d(kernel_size, stride=1, padding=(k-1)//2).

    x_ncdhw: [N, Cin, D, H, W] f32
    weight : [Cout, Cin, KD, KH, KW] f32   (PyTorch layout)
    bias   : [Cout] f32
    returns: [N, Cout, OD, OH, OW] f32
    """
    N, Cin, D, H, W = x_ncdhw.shape
    Cout, Cin2, KD, KH, KW = weight.shape
    assert Cin == Cin2
    p = (kernel_size - 1) // 2
    OD, OH, OW = D + 2 * p - KD + 1, H + 2 * p - KH + 1, W + 2 * p - KW + 1
    M = OD * OH * OW

    # bf16 before im2col so the materialized patches carry half the HBM bytes;
    # accumulation stays f32 inside the kernel.
    x = x_ncdhw.astype(jnp.bfloat16)
    if p > 0:
        x = jnp.pad(x, ((0, 0), (0, 0), (p, p), (p, p), (p, p)))

    # Transposed im2col: patches[n, (cin, kd, kh, kw), (od, oh, ow)].  kernel_size == 1 is
    # a pure reshape (no duplication, no pad).
    # TODO(synk): implicit GEMM over shifted slabs to avoid materializing this in HBM.
    if KD == KH == KW == 1:
        patches = x.reshape(N, Cin, M)
    else:
        slabs = [x[:, :, kd:kd + OD, kh:kh + OH, kw:kw + OW]
                 for kd in range(KD) for kh in range(KH) for kw in range(KW)]
        patches = jnp.stack(slabs, axis=2).reshape(N, Cin * KD * KH * KW, M)

    w2 = weight.reshape(Cout, Cin * KD * KH * KW).astype(jnp.bfloat16)
    b2 = bias.reshape(Cout, 1).astype(jnp.float32)

    y = conv3d_gemm(w2, patches, b2)                 # (N, Cout, M) f32, already NC(DHW)
    return y.reshape(N, Cout, OD, OH, OW)            # free reshape — no transpose needed


# ------------------------------------------------------------------------------ parameters
def init_params(key, in_planes, out_planes, kernel_size):
    """Mimics PyTorch Conv3d default init (kaiming_uniform(a=sqrt(5)) + uniform bias)."""
    kw_, kb_ = jax.random.split(key)
    fan_in = in_planes * kernel_size ** 3
    bound = 1.0 / math.sqrt(fan_in)
    weight = jax.random.uniform(
        kw_, (out_planes, in_planes, kernel_size, kernel_size, kernel_size),
        jnp.float32, -bound, bound)
    bias = jax.random.uniform(kb_, (out_planes,), jnp.float32, -bound, bound)
    return weight, bias


# ------------------------------------------------------------------------------------ main
if __name__ == "__main__":
    key = jax.random.PRNGKey(0)
    k_x, k_p = jax.random.split(key)

    in_planes, out_planes, kernel_size = 4, 128, 3
    N, D, H, W = 2, 8, 16, 16

    x = jax.random.normal(k_x, (N, in_planes, D, H, W), jnp.float32)
    weight, bias = init_params(k_p, in_planes, out_planes, kernel_size)

    fwd = jax.jit(functools.partial(single_conv3d_block, kernel_size=kernel_size))
    y = fwd(x, weight, bias)
    jax.block_until_ready(y)

    assert y.shape == (N, out_planes, D, H, W), y.shape
    assert bool(jnp.all(jnp.isfinite(y)))

    # Correctness check vs XLA's f32 conv (loose tolerance: the kernel feeds the MXU bf16).
    p = (kernel_size - 1) // 2
    ref = jax.lax.conv_general_dilated(
        x, weight, window_strides=(1, 1, 1), padding=[(p, p)] * 3,
        dimension_numbers=("NCDHW", "OIDHW", "NCDHW"),
    ) + bias.reshape(1, -1, 1, 1, 1)
    max_err = float(jnp.max(jnp.abs(y - ref)))
    assert jnp.allclose(y, ref, atol=3e-2, rtol=3e-2), max_err

    print("KERNEL_OK")
</pallas_src>

<mosaic_0001>
module attributes {stable_mosaic.version = 11 : i64} {
  func.func @_gemm_bias_kernel(%arg0: i32, %arg1: i32, %arg2: i32, %arg3: memref<128x108xbf16, #tpu.memory_space<vmem>>, %arg4: memref<1x108x1024xbf16, #tpu.memory_space<vmem>>, %arg5: memref<128x1xf32, #tpu.memory_space<vmem>>, %arg6: memref<1x128x1024xf32, #tpu.memory_space<vmem>>) attributes {dimension_semantics = [#tpu.dimension_semantics<parallel>, #tpu.dimension_semantics<parallel>, #tpu.dimension_semantics<arbitrary>], iteration_bounds = array<i64: 2, 2, 1>, scalar_prefetch = 0 : i64, scratch_operands = 0 : i64, tpu.core_type = #tpu.core_type<tc>, window_params = [{transform_indices = @transform_0, window_bounds = array<i64: 128, 108>}, {transform_indices = @transform_1, window_bounds = array<i64: 1, 108, 1024>}, {pipeline_mode = #tpu.pipeline_mode<synchronous>, transform_indices = @transform_2, window_bounds = array<i64: 128, 1>}, {transform_indices = @transform_3, window_bounds = array<i64: 1, 128, 1024>}]} {
    %c0 = arith.constant 0 : index
    %c0_0 = arith.constant 0 : index
    %0 = vector.load %arg3[%c0, %c0_0] : memref<128x108xbf16, #tpu.memory_space<vmem>>, vector<128x108xbf16>
    %c0_1 = arith.constant 0 : index
    %c0_2 = arith.constant 0 : index
    %c0_3 = arith.constant 0 : index
    %1 = vector.load %arg4[%c0_1, %c0_2, %c0_3] : memref<1x108x1024xbf16, #tpu.memory_space<vmem>>, vector<1x108x1024xbf16>
    %2 = vector.shape_cast %1 : vector<1x108x1024xbf16> to vector<108x1024xbf16>
    %cst = arith.constant dense<0.000000e+00> : vector<128x1024xf32>
    %3 = tpu.matmul %0, %2, %cst {dimension_numbers = #tpu.dot_dimension_numbers<[1], [0], [0], [1], [0, 0, 1, 1], [], []>} : vector<128x108xbf16>, vector<108x1024xbf16>, vector<128x1024xf32> -> vector<128x1024xf32>
    %c0_4 = arith.constant 0 : index
    %c0_5 = arith.constant 0 : index
    %4 = vector.load %arg5[%c0_4, %c0_5] : memref<128x1xf32, #tpu.memory_space<vmem>>, vector<128x1xf32>
    %5 = vector.broadcast %4 : vector<128x1xf32> to vector<128x1024xf32>
    %6 = arith.addf %3, %5 : vector<128x1024xf32>
    %c0_6 = arith.constant 0 : index
    %c0_7 = arith.constant 0 : index
    %c0_8 = arith.constant 0 : index
    %7 = vector.load %arg6[%c0_6, %c0_7, %c0_8] : memref<1x128x1024xf32, #tpu.memory_space<vmem>>, vector<1x128x1024xf32>
    %8 = vector.shape_cast %7 : vector<1x128x1024xf32> to vector<128x1024xf32>
    %9 = vector.shape_cast %6 : vector<128x1024xf32> to vector<1x128x1024xf32>
    tpu.vector_store %arg6[%c0_6, %c0_7, %c0_8], %9 {strides = array<i32>} : memref<1x128x1024xf32, #tpu.memory_space<vmem>>, vector<1x128x1024xf32>,
    return
  }
  func.func @transform_0(%arg0: i32, %arg1: i32, %arg2: i32) -> (i32, i32) {
    %c0_i32 = arith.constant 0 : i32
    %c0_i32_0 = arith.constant 0 : i32
    return %c0_i32, %arg2 : i32, i32
  }
  func.func @transform_1(%arg0: i32, %arg1: i32, %arg2: i32) -> (i32, i32, i32) {
    %c0_i32 = arith.constant 0 : i32
    return %arg0, %arg2, %arg1 : i32, i32, i32
  }
  func.func @transform_2(%arg0: i32, %arg1: i32, %arg2: i32) -> (i32, i32) {
    %c0_i32 = arith.constant 0 : i32
    %c0_i32_0 = arith.constant 0 : i32
    %c0_i32_1 = arith.constant 0 : i32
    return %c0_i32, %c0_i32_0 : i32, i32
  }
  func.func @transform_3(%arg0: i32, %arg1: i32, %arg2: i32) -> (i32, i32, i32) {
    %c0_i32 = arith.constant 0 : i32
    %c0_i32_0 = arith.constant 0 : i32
    return %arg0, %c0_i32, %arg1 : i32, i32, i32
  }
}

</mosaic_0001>

<llo_original>
// kernel: single_conv3d_block.1
$region0: #{single_conv3d_block.1}
  #allocation0 [shape = 'u32[]', space=smem, size = 0x4, offset = 0x4, fixed_abs, tag = 'smem constant byte address 0x4 - core index']
  #allocation1 [shape = 'u32[72,128]{1,0:T(1,128)}', space=vmem, size = 0x9000, scoped, tag = 'internal scratch']
  %s0 = inlined_call_operand.vmem [shape: bf16[128,108], index: 0, kind: input, shape index: {}]
  %s1 = inlined_call_operand.vmem [shape: bf16[2,108,2048], index: 1, kind: input, shape index: {}]
  %s2 = inlined_call_operand.vmem [shape: f32[128,1], index: 2, kind: input, shape index: {}]
  %s3 = inlined_call_operand.vmem [shape: f32[2,128,2048], index: 3, kind: output, shape index: {}]
  %s4 = sld [smem:[#allocation0]]
  $region87: #{single_conv3d_block.1} parent=0
    _
  %s6 = ssub.s32 1, %s4
  %s7 = scalar_select 0, %s6, %s4
  $region1: #{single_conv3d_block.1} parent=0
    #allocation2 [shape = 'u8[458752]{0}', space=vmem, size = 0x70000, scoped, tag = 'input window, operand 1']
    #allocation3 [shape = 'u8[1048576]{0}', space=vmem, size = 0x100000, scoped, tag = 'output window, operand 0']
    loop: start=0, step=1, limit=6
    $region2: #{single_conv3d_block.1} parent=1 // loop_pre_header
      _
    $region3: #{single_conv3d_block.1} parent=1 // loop_header
      %s9 = sphi 0, %s13
      %p10 = scmp.ge.s32.totalorder %s9, 6
      %s16 = sphi 0, %s35
      %s17 = sphi 0, %s31
      %s18 = sphi 0, %s27
      %s19 = sphi 0, %s16
      %s20 = sphi 0, %s17
      %s21 = sphi 0, %s18
      %s22 = sphi 0, %s19
      %s23 = sphi 0, %s20
      %s24 = sphi 0, %s21
      %s38 = sphi 0, %s40
      %s41 = sphi 0, %s38
      %s42 = sphi 0, %s41
      %s58 = sphi 0, %s42
      %s68 = sphi 0, %s70
      %s71 = sphi 0, %s68
      %s72 = sphi 0, %s71
      %s88 = sphi 0, %s72
      %s92 = sphi 0, %s92
      %s94 = sphi 0, %s92
      %s95 = sphi 0, %s94
      %s109 = sphi 0, %s95
      %s117 = sphi 0, %s119
      %s120 = sphi 0, %s117
      %s121 = sphi 0, %s120
      %s137 = sphi 0, %s121
    $region4: #{single_conv3d_block.1} parent=1 // loop_header_branch
      %12 = sbr.rel (%p10) target = $region8
    $region5: #{single_conv3d_block.1} parent=1 // loop_body
      %s14 = ssub.s32 %s9, 1
      %s15 = ssub.s32 %s9, 2
      %s25 = sadd.s32 1, %s18
      %p26 = scmp.ge.s32.totalorder %s25, 1
      %s27 = scalar_select %p26, 0, %s25
      %s28 = sadd.s32 1, %s17
      %s29 = scalar_select %p26, %s28, %s17
      %p30 = scmp.ge.s32.totalorder %s29, 2
      %s31 = scalar_select %p30, 0, %s29
      %s32 = sadd.s32 1, %s16
      %s33 = scalar_select %p30, %s32, %s16
      %p34 = scmp.ge.s32.totalorder %s33, 2
      %s35 = scalar_select %p34, 0, %s33
      %s36 = ssub.s32 %s18, %s27
      %p37 = scmp.eq.s32.totalorder %s36, 0
      %s39 = sadd.s32 %s38, 1
      %s40 = scalar_select %p37, %s38, %s39
      %p43 = pneg %p37
      %p44 = scmp.eq.s32.totalorder %s9, 3
      %p45 = por %p43, %p44
      %p46 = scmp.ne.s32.totalorder %s38, %s41
      %p47 = scmp.eq.s32.totalorder %s9, 0
      %p48 = por %p46, %p47
      %p49 = scmp.ne.s32.totalorder %s38, %s41
      %p50 = scmp.eq.s32.totalorder %s14, 3
      %p51 = por %p49, %p50
      %p52 = scmp.ne.s32.totalorder %s41, %s42
      %p53 = scmp.eq.s32.totalorder %s14, 0
      %p54 = por %p52, %p53
      %p55 = scmp.ne.s32.totalorder %s41, %s42
      %p56 = scmp.eq.s32.totalorder %s15, 3
      %p57 = por %p55, %p56
      %p59 = scmp.ne.s32.totalorder %s42, %s58
      %p60 = scmp.eq.s32.totalorder %s15, 0
      %p61 = por %p59, %p60
      %s62 = ssub.s32 %s16, %s35
      %s63 = ssub.s32 %s18, %s27
      %s64 = sor.u32 %s62, %s63
      %s65 = ssub.s32 %s17, %s31
      %s66 = sor.u32 %s64, %s65
      %p67 = scmp.eq.s32.totalorder %s66, 0
      %s69 = sadd.s32 %s68, 1
      %s70 = scalar_select %p67, %s68, %s69
      %p73 = pneg %p67
      %p74 = scmp.eq.s32.totalorder %s9, 3
      %p75 = por %p73, %p74
      %p76 = scmp.ne.s32.totalorder %s68, %s71
      %p77 = scmp.eq.s32.totalorder %s9, 0
      %p78 = por %p76, %p77
      %p79 = scmp.ne.s32.totalorder %s68, %s71
      %p80 = scmp.eq.s32.totalorder %s14, 3
      %p81 = por %p79, %p80
      %p82 = scmp.ne.s32.totalorder %s71, %s72
      %p83 = scmp.eq.s32.totalorder %s14, 0
      %p84 = por %p82, %p83
      %p85 = scmp.ne.s32.totalorder %s71, %s72
      %p86 = scmp.eq.s32.totalorder %s15, 3
      %p87 = por %p85, %p86
      %p89 = scmp.ne.s32.totalorder %s72, %s88
      %p90 = scmp.eq.s32.totalorder %s15, 0
      %p91 = por %p89, %p90
      %s93 = sadd.s32 %s92, 1
      %p96 = scmp.eq.s32.totalorder %s9, 3
      %p97 = scmp.ne.s32.totalorder %s92, %s94
      %p98 = scmp.eq.s32.totalorder %s9, 0
      %p99 = por %p97, %p98
      %p100 = scmp.ne.s32.totalorder %s92, %s94
      %p101 = scmp.eq.s32.totalorder %s14, 3
      %p102 = por %p100, %p101
      %p103 = scmp.ne.s32.totalorder %s94, %s95
      %p104 = scmp.eq.s32.totalorder %s14, 0
      %p105 = por %p103, %p104
      %p106 = scmp.ne.s32.totalorder %s94, %s95
      %p107 = scmp.eq.s32.totalorder %s15, 3
      %p108 = por %p106, %p107
      %p110 = scmp.ne.s32.totalorder %s95, %s109
      %p111 = scmp.eq.s32.totalorder %s15, 0
      %p112 = por %p110, %p111
      %s113 = ssub.s32 %s16, %s35
      %s114 = ssub.s32 %s17, %s31
      %s115 = sor.u32 %s113, %s114
      %p116 = scmp.eq.s32.totalorder %s115, 0
      %s118 = sadd.s32 %s117, 1
      %s119 = scalar_select %p116, %s117, %s118
      %p122 = pneg %p116
      %p123 = scmp.eq.s32.totalorder %s9, 3
      %p124 = por %p122, %p123
      %p125 = scmp.ne.s32.totalorder %s117, %s120
      %p126 = scmp.eq.s32.totalorder %s9, 0
      %p127 = por %p125, %p126
      %p128 = scmp.ne.s32.totalorder %s117, %s120
      %p129 = scmp.eq.s32.totalorder %s14, 3
      %p130 = por %p128, %p129
      %p131 = scmp.ne.s32.totalorder %s120, %s121
      %p132 = scmp.eq.s32.totalorder %s14, 0
      %p133 = por %p131, %p132
      %p134 = scmp.ne.s32.totalorder %s120, %s121
      %p135 = scmp.eq.s32.totalorder %s15, 3
      %p136 = por %p134, %p135
      %p138 = scmp.ne.s32.totalorder %s121, %s137
      %p139 = scmp.eq.s32.totalorder %s15, 0
      %p140 = por %p138, %p139
      %p141 = scmp.le.s32.totalorder 1, %s9
      %p142 = scmp.lt.s32.totalorder %s9, 5
      %p143 = pnand %p141, %p142
      %p144 = pneg %p143
      // Predicated region
      $region9: #{single_conv3d_block.1} parent=5 // pred_check
        _
      $region10: #{single_conv3d_block.1} parent=5 // pred_check_branch
        %146 = sbr.rel (%p143) target = $region12
      $region11: #{single_conv3d_block.1} parent=5 // pred_region
        %s147 = ssub.s32 %s9, 1
        // Predicated region
        $region13: #{single_conv3d_block.1} parent=11 // pred_check
          %p148 = pneg %p54
        $region14: #{single_conv3d_block.1} parent=11 // pred_check_branch
          %150 = sbr.rel (%p148) target = $region16
        $region15: #{single_conv3d_block.1} parent=11 // pred_region
          %p151 = scmp.lt.s32.totalorder %s21, 0
          %s152 = scalar_select %p151, %s21, 0
          %s153 = smul.addr %s152, 4
          %s154 = scalar_lea.vmem %s0, %s153
        $region16: #{single_conv3d_block.1} parent=11 // pred_fallthru
          _
        // Predicated region
        $region17: #{single_conv3d_block.1} parent=11 // pred_check
          %p155 = pneg %p105
        $region18: #{single_conv3d_block.1} parent=11 // pred_check_branch
          %157 = sbr.rel (%p155) target = $region20
        $region19: #{single_conv3d_block.1} parent=11 // pred_region
          _
        $region20: #{single_conv3d_block.1} parent=11 // pred_fallthru
          _
      $region12: #{single_conv3d_block.1} parent=5 // pred_fallthru
        _
      %p158 = scmp.lt.s32.totalorder %s9, 4
      // Predicated region
      $region21: #{single_conv3d_block.1} parent=5 // pred_check
        %p159 = pneg %p158
      $region22: #{single_conv3d_block.1} parent=5 // pred_check_branch
        %161 = sbr.rel (%p159) target = $region24
      $region23: #{single_conv3d_block.1} parent=5 // pred_region
        // Predicated region
        $region25: #{single_conv3d_block.1} parent=23 // pred_check
          %p162 = pneg %p78
        $region26: #{single_conv3d_block.1} parent=23 // pred_check_branch
          %164 = sbr.rel (%p162) target = $region28
        $region27: #{single_conv3d_block.1} parent=23 // pred_region
          %s165 = sand.u32 %s68, 1
          %s166 = sand.u32 %s68, 1
          %s167 = smul.addr %s166, 448
          %s168 = scalar_lea.vmem [#allocation2], %s167
          %s169 = smul.u32 14, %s18
          %s170 = smul.u32 8, %s17
          %s171 = smul.addr %s169, 16
          %s172 = sadd.s32 %s170, %s171
          %s173 = smul.addr %s16, 224
          %s174 = sadd.s32 %s172, %s173
          %s175 = smul.addr %s174, 4
          %s176 = scalar_lea.vmem %s1, %s175
          // Predicated region
          $region29: #{single_conv3d_block.1} parent=27 // pred_check
            _
          $region30: #{single_conv3d_block.1} parent=27 // pred_check_branch
            %178 = sbr.rel (0) target = $region32
          $region31: #{single_conv3d_block.1} parent=27 // pred_region
            // Predicated region
            $region33: #{single_conv3d_block.1} parent=31 // pred_check
              _
            $region34: #{single_conv3d_block.1} parent=31 // pred_check_branch
              %180 = sbr.rel (0) target = $region36
            $region35: #{single_conv3d_block.1} parent=31 // pred_region
              loop: start=0, step=1, limit=1
              $region37: #{single_conv3d_block.1} parent=35 // loop_pre_header
                _
              $region38: #{single_conv3d_block.1} parent=35 // loop_header
                %s182 = sphi 0, %s186
                %p183 = scmp.ge.s32.totalorder %s182, 1
                %s187 = sphi %s176, %s176
                %s188 = sphi %s168, %s168
              $region39: #{single_conv3d_block.1} parent=35 // loop_header_branch
                %185 = sbr.rel (%p183) target = $region43
              $region40: #{single_conv3d_block.1} parent=35 // loop_body
                %v189 = vld [vmem:[%s187] sm:$0xff]
                %190 = vst [vmem:[%s188] sm:$0xff] %v189
                %v191 = vld [vmem:[%s187 + $0x8] sm:$0xff]
                %192 = vst [vmem:[%s188 + $0x8] sm:$0xff] %v191
                %v193 = vld [vmem:[%s187 + $0x10] sm:$0xff]
                %194 = vst [vmem:[%s188 + $0x10] sm:$0xff] %v193
                %v195 = vld [vmem:[%s187 + $0x18] sm:$0xff]
                %196 = vst [vmem:[%s188 + $0x18] sm:$0xff] %v195
                %v197 = vld [vmem:[%s187 + $0x40] sm:$0xff]
                %198 = vst [vmem:[%s188 + $0x20] sm:$0xff] %v197
                %v199 = vld [vmem:[%s187 + $0x48] sm:$0xff]
                %200 = vst [vmem:[%s188 + $0x28] sm:$0xff] %v199
                %v201 = vld [vmem:[%s187 + $0x50] sm:$0xff]
                %202 = vst [vmem:[%s188 + $0x30] sm:$0xff] %v201
                %v203 = vld [vmem:[%s187 + $0x58] sm:$0xff]
                %204 = vst [vmem:[%s188 + $0x38] sm:$0xff] %v203
                %v205 = vld [vmem:[%s187 + $0x80] sm:$0xff]
                %206 = vst [vmem:[%s188 + $0x40] sm:$0xff] %v205
                %v207 = vld [vmem:[%s187 + $0x88] sm:$0xff]
                %208 = vst [vmem:[%s188 + $0x48] sm:$0xff] %v207
                %v209 = vld [vmem:[%s187 + $0x90] sm:$0xff]
                %210 = vst [vmem:[%s188 + $0x50] sm:$0xff] %v209
                %v211 = vld [vmem:[%s187 + $0x98] sm:$0xff]
                %212 = vst [vmem:[%s188 + $0x58] sm:$0xff] %v211
                %v213 = vld [vmem:[%s187 + $0xc0] sm:$0xff]
                %214 = vst [vmem:[%s188 + $0x60] sm:$0xff] %v213
                %v215 = vld [vmem:[%s187 + $0xc8] sm:$0xff]
                %216 = vst [vmem:[%s188 + $0x68] sm:$0xff] %v215
                %v217 = vld [vmem:[%s187 + $0xd0] sm:$0xff]
                %218 = vst [vmem:[%s188 + $0x70] sm:$0xff] %v217
                %v219 = vld [vmem:[%s187 + $0xd8] sm:$0xff]
                %220 = vst [vmem:[%s188 + $0x78] sm:$0xff] %v219
                %v221 = vld [vmem:[%s187 + $0x100] sm:$0xff]
                %222 = vst [vmem:[%s188 + $0x80] sm:$0xff] %v221
                %v223 = vld [vmem:[%s187 + $0x108] sm:$0xff]
                %224 = vst [vmem:[%s188 + $0x88] sm:$0xff] %v223
                %v225 = vld [vmem:[%s187 + $0x110] sm:$0xff]
                %226 = vst [vmem:[%s188 + $0x90] sm:$0xff] %v225
                %v227 = vld [vmem:[%s187 + $0x118] sm:$0xff]
                %228 = vst [vmem:[%s188 + $0x98] sm:$0xff] %v227
                %v229 = vld [vmem:[%s187 + $0x140] sm:$0xff]
                %230 = vst [vmem:[%s188 + $0xa0] sm:$0xff] %v229
                %v231 = vld [vmem:[%s187 + $0x148] sm:$0xff]
                %232 = vst [vmem:[%s188 + $0xa8] sm:$0xff] %v231
                %v233 = vld [vmem:[%s187 + $0x150] sm:$0xff]
                %234 = vst [vmem:[%s188 + $0xb0] sm:$0xff] %v233
                %v235 = vld [vmem:[%s187 + $0x158] sm:$0xff]
                %236 = vst [vmem:[%s188 + $0xb8] sm:$0xff] %v235
                %v237 = vld [vmem:[%s187 + $0x180] sm:$0xff]
                %238 = vst [vmem:[%s188 + $0xc0] sm:$0xff] %v237
                %v239 = vld [vmem:[%s187 + $0x188] sm:$0xff]
                %240 = vst [vmem:[%s188 + $0xc8] sm:$0xff] %v239
                %v241 = vld [vmem:[%s187 + $0x190] sm:$0xff]
                %242 = vst [vmem:[%s188 + $0xd0] sm:$0xff] %v241
                %v243 = vld [vmem:[%s187 + $0x198] sm:$0xff]
                %244 = vst [vmem:[%s188 + $0xd8] sm:$0xff] %v243
                %v245 = vld [vmem:[%s187 + $0x1c0] sm:$0xff]
                %246 = vst [vmem:[%s188 + $0xe0] sm:$0xff] %v245
                %v247 = vld [vmem:[%s187 + $0x1c8] sm:$0xff]
                %248 = vst [vmem:[%s188 + $0xe8] sm:$0xff] %v247
                %v249 = vld [vmem:[%s187 + $0x1d0] sm:$0xff]
                %250 = vst [vmem:[%s188 + $0xf0] sm:$0xff] %v249
                %v251 = vld [vmem:[%s187 + $0x1d8] sm:$0xff]
                %252 = vst [vmem:[%s188 + $0xf8] sm:$0xff] %v251
                %v253 = vld [vmem:[%s187 + $0x200] sm:$0xff]
                %254 = vst [vmem:[%s188 + $0x100] sm:$0xff] %v253
                %v255 = vld [vmem:[%s187 + $0x208] sm:$0xff]
                %256 = vst [vmem:[%s188 + $0x108] sm:$0xff] %v255
                %v257 = vld [vmem:[%s187 + $0x210] sm:$0xff]
                %258 = vst [vmem:[%s188 + $0x110] sm:$0xff] %v257
                %v259 = vld [vmem:[%s187 + $0x218] sm:$0xff]
                %260 = vst [vmem:[%s188 + $0x118] sm:$0xff] %v259
                %v261 = vld [vmem:[%s187 + $0x240] sm:$0xff]
                %262 = vst [vmem:[%s188 + $0x120] sm:$0xff] %v261
                %v263 = vld [vmem:[%s187 + $0x248] sm:$0xff]
                %264 = vst [vmem:[%s188 + $0x128] sm:$0xff] %v263
                %v265 = vld [vmem:[%s187 + $0x250] sm:$0xff]
                %266 = vst [vmem:[%s188 + $0x130] sm:$0xff] %v265
                %v267 = vld [vmem:[%s187 + $0x258] sm:$0xff]
                %268 = vst [vmem:[%s188 + $0x138] sm:$0xff] %v267
                %v269 = vld [vmem:[%s187 + $0x280] sm:$0xff]
                %270 = vst [vmem:[%s188 + $0x140] sm:$0xff] %v269
                %v271 = vld [vmem:[%s187 + $0x288] sm:$0xff]
                %272 = vst [vmem:[%s188 + $0x148] sm:$0xff] %v271
                %v273 = vld [vmem:[%s187 + $0x290] sm:$0xff]
                %274 = vst [vmem:[%s188 + $0x150] sm:$0xff] %v273
                %v275 = vld [vmem:[%s187 + $0x298] sm:$0xff]
                %276 = vst [vmem:[%s188 + $0x158] sm:$0xff] %v275
                %v277 = vld [vmem:[%s187 + $0x2c0] sm:$0xff]
                %278 = vst [vmem:[%s188 + $0x160] sm:$0xff] %v277
                %v279 = vld [vmem:[%s187 + $0x2c8] sm:$0xff]
                %280 = vst [vmem:[%s188 + $0x168] sm:$0xff] %v279
                %v281 = vld [vmem:[%s187 + $0x2d0] sm:$0xff]
                %282 = vst [vmem:[%s188 + $0x170] sm:$0xff] %v281
                %v283 = vld [vmem:[%s187 + $0x2d8] sm:$0xff]
                %284 = vst [vmem:[%s188 + $0x178] sm:$0xff] %v283
                %v285 = vld [vmem:[%s187 + $0x300] sm:$0xff]
                %286 = vst [vmem:[%s188 + $0x180] sm:$0xff] %v285
                %v287 = vld [vmem:[%s187 + $0x308] sm:$0xff]
                %288 = vst [vmem:[%s188 + $0x188] sm:$0xff] %v287
                %v289 = vld [vmem:[%s187 + $0x310] sm:$0xff]
                %290 = vst [vmem:[%s188 + $0x190] sm:$0xff] %v289
                %v291 = vld [vmem:[%s187 + $0x318] sm:$0xff]
                %292 = vst [vmem:[%s188 + $0x198] sm:$0xff] %v291
                %v293 = vld [vmem:[%s187 + $0x340] sm:$0xff]
                %294 = vst [vmem:[%s188 + $0x1a0] sm:$0xff] %v293
                %v295 = vld [vmem:[%s187 + $0x348] sm:$0xff]
                %296 = vst [vmem:[%s188 + $0x1a8] sm:$0xff] %v295
                %v297 = vld [vmem:[%s187 + $0x350] sm:$0xff]
                %298 = vst [vmem:[%s188 + $0x1b0] sm:$0xff] %v297
                %v299 = vld [vmem:[%s187 + $0x358] sm:$0xff]
                %300 = vst [vmem:[%s188 + $0x1b8] sm:$0xff] %v299
              $region41: #{single_conv3d_block.1} parent=35 // loop_footer
                %s186 = sadd.s32 1, %s182
              $region42: #{single_conv3d_block.1} parent=35 // loop_footer_branch
                %181 = sbr.rel target = $region38
              $region43: #{single_conv3d_block.1} parent=35 // loop_exit
                _
            $region36: #{single_conv3d_block.1} parent=31 // pred_fallthru
              _
            // Predicated region
            $region44: #{single_conv3d_block.1} parent=31 // pred_check
              _
            $region45: #{single_conv3d_block.1} parent=31 // pred_check_branch
              %302 = sbr.rel target = $region47
            $region46: #{single_conv3d_block.1} parent=31 // pred_region
              _
            $region47: #{single_conv3d_block.1} parent=31 // pred_fallthru
              _
          $region32: #{single_conv3d_block.1} parent=27 // pred_fallthru
            _
          %303 = vnop
        $region28: #{single_conv3d_block.1} parent=23 // pred_fallthru
          _
      $region24: #{single_conv3d_block.1} parent=5 // pred_fallthru
        _
      %p304 = scmp.le.s32.totalorder 1, %s9
      %p305 = scmp.lt.s32.totalorder %s9, 5
      %p306 = pnand %p304, %p305
      %p307 = pneg %p306
      // Predicated region
      $region48: #{single_conv3d_block.1} parent=5 // pred_check
        _
      $region49: #{single_conv3d_block.1} parent=5 // pred_check_branch
        %309 = sbr.rel (%p306) target = $region51
      $region50: #{single_conv3d_block.1} parent=5 // pred_region
        %s310 = ssub.s32 %s9, 1
        %s311 = sand.u32 %s71, 1
        %s312 = sand.u32 %s71, 1
        %s313 = smul.addr %s312, 448
        %s314 = scalar_lea.vmem [#allocation2], %s313
        // Predicated region
        $region52: #{single_conv3d_block.1} parent=50 // pred_check
          %p315 = pneg %p84
        $region53: #{single_conv3d_block.1} parent=50 // pred_check_branch
          %317 = sbr.rel (%p315) target = $region55
        $region54: #{single_conv3d_block.1} parent=50 // pred_region
          _
        $region55: #{single_conv3d_block.1} parent=50 // pred_fallthru
          _
        %p318 = scmp.lt.s32.totalorder %s21, 0
        %s319 = scalar_select %p318, %s21, 0
        %s320 = smul.addr %s319, 4
        %s321 = scalar_lea.vmem %s0, %s320
        %p322 = pneg %p54
        %p323 = pneg %p51
        %s324 = sand.u32 %s71, 1
        %s325 = sand.u32 %s71, 1
        %s326 = smul.addr %s325, 448
        %s327 = scalar_lea.vmem [#allocation2], %s326
        %p328 = pneg %p84
        %p329 = pneg %p81
        %p330 = pneg %p105
        %p331 = pneg %p102
        %p332 = pneg %p133
        %p333 = pneg %p130
        %s334 = sand.u32 %s120, 1
        %s335 = sand.u32 %s120, 1
        %s336 = smul.addr %s335, 1024
        %s337 = scalar_lea.vmem [#allocation3], %s336
        %p338 = scmp.lt.s32.totalorder %s21, 0
        %s339 = scalar_select %p338, %s21, 0
        %s340 = smul.addr %s339, 4
        %s341 = scalar_lea.vmem %s0, %s340
        %s342 = smul.u32 14, %s21
        %s343 = smul.u32 8, %s20
        %s344 = smul.u32 8, %s20
        %v346 = vld [vmem:[%s341] sm:$0xf]
        %v347 = vld [vmem:[%s341 + $0x4] sm:$0xf]
        %v348 = vld [vmem:[%s341 + $0x8] sm:$0xf]
        %v349 = vld [vmem:[%s341 + $0xc] sm:$0xf]
        %v350 = vld [vmem:[%s341 + $0x10] sm:$0xf]
        %v351 = vld [vmem:[%s341 + $0x14] sm:$0xf]
        %v352 = vld [vmem:[%s341 + $0x18] sm:$0xf]
        %v353 = vld [vmem:[%s341 + $0x1c] sm:$0xf]
        %v354 = vld [vmem:[%s341 + $0x20] sm:$0xf]
        %v355 = vld [vmem:[%s341 + $0x24] sm:$0xf]
        %v356 = vld [vmem:[%s341 + $0x28] sm:$0xf]
        %v357 = vld [vmem:[%s341 + $0x2c] sm:$0xf]
        %v358 = vld [vmem:[%s341 + $0x30] sm:$0xf]
        %v359 = vld [vmem:[%s341 + $0x34] sm:$0xf]
        %v360 = vld [vmem:[%s341 + $0x38] sm:$0xf]
        %v361 = vld [vmem:[%s341 + $0x3c] sm:$0xf]
        %v362 = vld [vmem:[%s314] sm:$0xff]
        %v363 = vld [vmem:[%s314 + $0x8] sm:$0xff]
        %v364 = vld [vmem:[%s314 + $0x10] sm:$0xff]
        %v365 = vld [vmem:[%s314 + $0x18] sm:$0xff]
        %v366 = vld [vmem:[%s314 + $0x20] sm:$0xff]
        %v367 = vld [vmem:[%s314 + $0x28] sm:$0xff]
        %v368 = vld [vmem:[%s314 + $0x30] sm:$0xff]
        %v369 = vld [vmem:[%s314 + $0x38] sm:$0xff]
        %v370 = vld [vmem:[%s314 + $0x40] sm:$0xff]
        %v371 = vld [vmem:[%s314 + $0x48] sm:$0xff]
        %v372 = vld [vmem:[%s314 + $0x50] sm:$0xff]
        %v373 = vld [vmem:[%s314 + $0x58] sm:$0xff]
        %v374 = vld [vmem:[%s314 + $0x60] sm:$0xff]
        %v375 = vld [vmem:[%s314 + $0x68] sm:$0xff]
        %v376 = vld [vmem:[%s314 + $0x70] sm:$0xff]
        %v377 = vld [vmem:[%s314 + $0x78] sm:$0xff]
        %v378 = vld [vmem:[%s314 + $0x80] sm:$0xff]
        %v379 = vld [vmem:[%s314 + $0x88] sm:$0xff]
        %v380 = vld [vmem:[%s314 + $0x90] sm:$0xff]
        %v381 = vld [vmem:[%s314 + $0x98] sm:$0xff]
        %v382 = vld [vmem:[%s314 + $0xa0] sm:$0xff]
        %v383 = vld [vmem:[%s314 + $0xa8] sm:$0xff]
        %v384 = vld [vmem:[%s314 + $0xb0] sm:$0xff]
        %v385 = vld [vmem:[%s314 + $0xb8] sm:$0xff]
        %v386 = vld [vmem:[%s314 + $0xc0] sm:$0xff]
        %v387 = vld [vmem:[%s314 + $0xc8] sm:$0xff]
        %v388 = vld [vmem:[%s314 + $0xd0] sm:$0xff]
        %v389 = vld [vmem:[%s314 + $0xd8] sm:$0xff]
        %v390 = vld [vmem:[%s314 + $0xe0] sm:$0xff]
        %v391 = vld [vmem:[%s314 + $0xe8] sm:$0xff]
        %v392 = vld [vmem:[%s314 + $0xf0] sm:$0xff]
        %v393 = vld [vmem:[%s314 + $0xf8] sm:$0xff]
        %v394 = vld [vmem:[%s314 + $0x100] sm:$0xff]
        %v395 = vld [vmem:[%s314 + $0x108] sm:$0xff]
        %v396 = vld [vmem:[%s314 + $0x110] sm:$0xff]
        %v397 = vld [vmem:[%s314 + $0x118] sm:$0xff]
        %v398 = vld [vmem:[%s314 + $0x120] sm:$0xff]
        %v399 = vld [vmem:[%s314 + $0x128] sm:$0xff]
        %v400 = vld [vmem:[%s314 + $0x130] sm:$0xff]
        %v401 = vld [vmem:[%s314 + $0x138] sm:$0xff]
        %v402 = vld [vmem:[%s314 + $0x140] sm:$0xff]
        %v403 = vld [vmem:[%s314 + $0x148] sm:$0xff]
        %v404 = vld [vmem:[%s314 + $0x150] sm:$0xff]
        %v405 = vld [vmem:[%s314 + $0x158] sm:$0xff]
        %v406 = vld [vmem:[%s314 + $0x160] sm:$0xff]
        %v407 = vld [vmem:[%s314 + $0x168] sm:$0xff]
        %v408 = vld [vmem:[%s314 + $0x170] sm:$0xff]
        %v409 = vld [vmem:[%s314 + $0x178] sm:$0xff]
        %v410 = vld [vmem:[%s314 + $0x180] sm:$0xff]
        %v411 = vld [vmem:[%s314 + $0x188] sm:$0xff]
        %v412 = vld [vmem:[%s314 + $0x190] sm:$0xff]
        %v413 = vld [vmem:[%s314 + $0x198] sm:$0xff]
        %v414 = vld [vmem:[%s314 + $0x1a0] sm:$0x33]
        %v415 = vld [vmem:[%s314 + $0x1a8] sm:$0x33]
        %v416 = vld [vmem:[%s314 + $0x1b0] sm:$0x33]
        %v417 = vld [vmem:[%s314 + $0x1b8] sm:$0x33]
        %v418 = vld [vmem:[%s2] sm:$0xff]
        %v419 = vld [vmem:[%s2 + $0x8] sm:$0xff]
        %v420 = vld [vmem:[%s2 + $0x10] sm:$0xff]
        %v421 = vld [vmem:[%s2 + $0x18] sm:$0xff]
        %v422 = vld [vmem:[%s2 + $0x20] sm:$0xff]
        %v423 = vld [vmem:[%s2 + $0x28] sm:$0xff]
        %v424 = vld [vmem:[%s2 + $0x30] sm:$0xff]
        %v425 = vld [vmem:[%s2 + $0x38] sm:$0xff]
        %v426 = vld [vmem:[%s2 + $0x40] sm:$0xff]
        %v427 = vld [vmem:[%s2 + $0x48] sm:$0xff]
        %v428 = vld [vmem:[%s2 + $0x50] sm:$0xff]
        %v429 = vld [vmem:[%s2 + $0x58] sm:$0xff]
        %v430 = vld [vmem:[%s2 + $0x60] sm:$0xff]
        %v431 = vld [vmem:[%s2 + $0x68] sm:$0xff]
        %v432 = vld [vmem:[%s2 + $0x70] sm:$0xff]
        %v433 = vld [vmem:[%s2 + $0x78] sm:$0xff]
        %435 = vset.pattern.permute.xlu0 0
        %436 = vperm.xlu0 %435, %v418
        %v437 = vpop.permute.xlu0 %436
        %440 = vset.pattern.permute.xlu0 0
        %441 = vperm.xlu0 %440, %v419
        %v442 = vpop.permute.xlu0 %441
        %445 = vset.pattern.permute.xlu0 0
        %446 = vperm.xlu0 %445, %v420
        %v447 = vpop.permute.xlu0 %446
        %450 = vset.pattern.permute.xlu0 0
        %451 = vperm.xlu0 %450, %v421
        %v452 = vpop.permute.xlu0 %451
        %455 = vset.pattern.permute.xlu0 0
        %456 = vperm.xlu0 %455, %v422
        %v457 = vpop.permute.xlu0 %456
        %460 = vset.pattern.permute.xlu0 0
        %461 = vperm.xlu0 %460, %v423
        %v462 = vpop.permute.xlu0 %461
        %465 = vset.pattern.permute.xlu0 0
        %466 = vperm.xlu0 %465, %v424
        %v467 = vpop.permute.xlu0 %466
        %470 = vset.pattern.permute.xlu0 0
        %471 = vperm.xlu0 %470, %v425
        %v472 = vpop.permute.xlu0 %471
        %475 = vset.pattern.permute.xlu0 0
        %476 = vperm.xlu0 %475, %v426
        %v477 = vpop.permute.xlu0 %476
        %480 = vset.pattern.permute.xlu0 0
        %481 = vperm.xlu0 %480, %v427
        %v482 = vpop.permute.xlu0 %481
        %485 = vset.pattern.permute.xlu0 0
        %486 = vperm.xlu0 %485, %v428
        %v487 = vpop.permute.xlu0 %486
        %490 = vset.pattern.permute.xlu0 0
        %491 = vperm.xlu0 %490, %v429
        %v492 = vpop.permute.xlu0 %491
        %495 = vset.pattern.permute.xlu0 0
        %496 = vperm.xlu0 %495, %v430
        %v497 = vpop.permute.xlu0 %496
        %500 = vset.pattern.permute.xlu0 0
        %501 = vperm.xlu0 %500, %v431
        %v502 = vpop.permute.xlu0 %501
        %505 = vset.pattern.permute.xlu0 0
        %506 = vperm.xlu0 %505, %v432
        %v507 = vpop.permute.xlu0 %506
        %510 = vset.pattern.permute.xlu0 0
        %511 = vperm.xlu0 %510, %v433
        %v512 = vpop.permute.xlu0 %511
        %v530 = vunpack.c.l.b16 %v346
        %v531 = vunpack.c.l.b16 %v347
        %v532 = vunpack.c.l.b16 %v348
        %v533 = vunpack.c.l.b16 %v349
        %v534 = vunpack.c.l.b16 %v350
        %v535 = vunpack.c.l.b16 %v351
        %v536 = vunpack.c.l.b16 %v352
        %v537 = vunpack.c.l.b16 %v353
        %v538 = vunpack.c.l.b16 %v354
        %v539 = vunpack.c.l.b16 %v355
        %v540 = vunpack.c.l.b16 %v356
        %v541 = vunpack.c.l.b16 %v357
        %v542 = vunpack.c.l.b16 %v358
        %v543 = vunpack.c.l.b16 %v359
        %v544 = vunpack.c.l.b16 %v360
        %v545 = vunpack.c.l.b16 %v361
        %v546 = vpack.c.b16 %v531, %v530
        %v547 = vpack.c.b16 %v533, %v532
        %v548 = vpack.c.b16 %v535, %v534
        %v549 = vpack.c.b16 %v537, %v536
        %v550 = vpack.c.b16 %v539, %v538
        %v551 = vpack.c.b16 %v541, %v540
        %v552 = vpack.c.b16 %v543, %v542
        %v553 = vpack.c.b16 %v545, %v544
        %v610 = vunpack.c.l.b16 %v362
        %v611 = vunpack.c.h.b16 %v362
        %v612 = vunpack.c.l.b16 %v363
        %v613 = vunpack.c.h.b16 %v363
        %v614 = vunpack.c.l.b16 %v364
        %v615 = vunpack.c.h.b16 %v364
        %v616 = vunpack.c.l.b16 %v365
        %v617 = vunpack.c.h.b16 %v365
        %v618 = vunpack.c.l.b16 %v366
        %v619 = vunpack.c.h.b16 %v366
        %v620 = vunpack.c.l.b16 %v367
        %v621 = vunpack.c.h.b16 %v367
        %v622 = vunpack.c.l.b16 %v368
        %v623 = vunpack.c.h.b16 %v368
        %v624 = vunpack.c.l.b16 %v369
        %v625 = vunpack.c.h.b16 %v369
        %v626 = vunpack.c.l.b16 %v370
        %v627 = vunpack.c.h.b16 %v370
        %v628 = vunpack.c.l.b16 %v371
        %v629 = vunpack.c.h.b16 %v371
        %v630 = vunpack.c.l.b16 %v372
        %v631 = vunpack.c.h.b16 %v372
        %v632 = vunpack.c.l.b16 %v373
        %v633 = vunpack.c.h.b16 %v373
        %v634 = vunpack.c.l.b16 %v374
        %v635 = vunpack.c.h.b16 %v374
        %v636 = vunpack.c.l.b16 %v375
        %v637 = vunpack.c.h.b16 %v375
        %v638 = vunpack.c.l.b16 %v376
        %v639 = vunpack.c.h.b16 %v376
        %v640 = vunpack.c.l.b16 %v377
        %v641 = vunpack.c.h.b16 %v377
        %v642 = vunpack.c.l.b16 %v378
        %v643 = vunpack.c.h.b16 %v378
        %v644 = vunpack.c.l.b16 %v379
        %v645 = vunpack.c.h.b16 %v379
        %v646 = vunpack.c.l.b16 %v380
        %v647 = vunpack.c.h.b16 %v380
        %v648 = vunpack.c.l.b16 %v381
        %v649 = vunpack.c.h.b16 %v381
        %v650 = vunpack.c.l.b16 %v382
        %v651 = vunpack.c.h.b16 %v382
        %v652 = vunpack.c.l.b16 %v383
        %v653 = vunpack.c.h.b16 %v383
        %v654 = vunpack.c.l.b16 %v384
        %v655 = vunpack.c.h.b16 %v384
        %v656 = vunpack.c.l.b16 %v385
        %v657 = vunpack.c.h.b16 %v385
        %v658 = vunpack.c.l.b16 %v386
        %v659 = vunpack.c.h.b16 %v386
        %v660 = vunpack.c.l.b16 %v387
        %v661 = vunpack.c.h.b16 %v387
        %v662 = vunpack.c.l.b16 %v388
        %v663 = vunpack.c.h.b16 %v388
        %v664 = vunpack.c.l.b16 %v389
        %v665 = vunpack.c.h.b16 %v389
        %v666 = vunpack.c.l.b16 %v390
        %v667 = vunpack.c.h.b16 %v390
        %v668 = vunpack.c.l.b16 %v391
        %v669 = vunpack.c.h.b16 %v391
        %v670 = vunpack.c.l.b16 %v392
        %v671 = vunpack.c.h.b16 %v392
        %v672 = vunpack.c.l.b16 %v393
        %v673 = vunpack.c.h.b16 %v393
        %v674 = vunpack.c.l.b16 %v394
        %v675 = vunpack.c.h.b16 %v394
        %v676 = vunpack.c.l.b16 %v395
        %v677 = vunpack.c.h.b16 %v395
        %v678 = vunpack.c.l.b16 %v396
        %v679 = vunpack.c.h.b16 %v396
        %v680 = vunpack.c.l.b16 %v397
        %v681 = vunpack.c.h.b16 %v397
        %v682 = vunpack.c.l.b16 %v398
        %v683 = vunpack.c.h.b16 %v398
        %v684 = vunpack.c.l.b16 %v399
        %v685 = vunpack.c.h.b16 %v399
        %v686 = vunpack.c.l.b16 %v400
        %v687 = vunpack.c.h.b16 %v400
        %v688 = vunpack.c.l.b16 %v401
        %v689 = vunpack.c.h.b16 %v401
        %v690 = vunpack.c.l.b16 %v402
        %v691 = vunpack.c.h.b16 %v402
        %v692 = vunpack.c.l.b16 %v403
        %v693 = vunpack.c.h.b16 %v403
        %v694 = vunpack.c.l.b16 %v404
        %v695 = vunpack.c.h.b16 %v404
        %v696 = vunpack.c.l.b16 %v405
        %v697 = vunpack.c.h.b16 %v405
        %v698 = vunpack.c.l.b16 %v406
        %v699 = vunpack.c.h.b16 %v406
        %v700 = vunpack.c.l.b16 %v407
        %v701 = vunpack.c.h.b16 %v407
        %v702 = vunpack.c.l.b16 %v408
        %v703 = vunpack.c.h.b16 %v408
        %v704 = vunpack.c.l.b16 %v409
        %v705 = vunpack.c.h.b16 %v409
        %v706 = vunpack.c.l.b16 %v410
        %v707 = vunpack.c.h.b16 %v410
        %v708 = vunpack.c.l.b16 %v411
        %v709 = vunpack.c.h.b16 %v411
        %v710 = vunpack.c.l.b16 %v412
        %v711 = vunpack.c.h.b16 %v412
        %v712 = vunpack.c.l.b16 %v413
        %v713 = vunpack.c.h.b16 %v413
        %v714 = vunpack.c.l.b16 %v414
        %v715 = vunpack.c.h.b16 %v414
        %v716 = vunpack.c.l.b16 %v415
        %v717 = vunpack.c.h.b16 %v415
        %v718 = vunpack.c.l.b16 %v416
        %v719 = vunpack.c.h.b16 %v416
        %v720 = vunpack.c.l.b16 %v417
        %v721 = vunpack.c.h.b16 %v417
        %v722 = vpack.c.b16 %v618, %v610
        %v723 = vpack.c.b16 %v619, %v611
        %v724 = vpack.c.b16 %v620, %v612
        %v725 = vpack.c.b16 %v621, %v613
        %v726 = vpack.c.b16 %v622, %v614
        %v727 = vpack.c.b16 %v623, %v615
        %v728 = vpack.c.b16 %v624, %v616
        %v729 = vpack.c.b16 %v625, %v617
        %v730 = vpack.c.b16 %v634, %v626
        %v731 = vpack.c.b16 %v635, %v627
        %v732 = vpack.c.b16 %v636, %v628
        %v733 = vpack.c.b16 %v637, %v629
        %v734 = vpack.c.b16 %v638, %v630
        %v735 = vpack.c.b16 %v639, %v631
        %v736 = vpack.c.b16 %v640, %v632
        %v737 = vpack.c.b16 %v641, %v633
        %v738 = vpack.c.b16 %v650, %v642
        %v739 = vpack.c.b16 %v651, %v643
        %v740 = vpack.c.b16 %v652, %v644
        %v741 = vpack.c.b16 %v653, %v645
        %v742 = vpack.c.b16 %v654, %v646
        %v743 = vpack.c.b16 %v655, %v647
        %v744 = vpack.c.b16 %v656, %v648
        %v745 = vpack.c.b16 %v657, %v649
        %v746 = vpack.c.b16 %v666, %v658
        %v747 = vpack.c.b16 %v667, %v659
        %v748 = vpack.c.b16 %v668, %v660
        %v749 = vpack.c.b16 %v669, %v661
        %v750 = vpack.c.b16 %v670, %v662
        %v751 = vpack.c.b16 %v671, %v663
        %v752 = vpack.c.b16 %v672, %v664
        %v753 = vpack.c.b16 %v673, %v665
        %v754 = vpack.c.b16 %v682, %v674
        %v755 = vpack.c.b16 %v683, %v675
        %v756 = vpack.c.b16 %v684, %v676
        %v757 = vpack.c.b16 %v685, %v677
        %v758 = vpack.c.b16 %v686, %v678
        %v759 = vpack.c.b16 %v687, %v679
        %v760 = vpack.c.b16 %v688, %v680
        %v761 = vpack.c.b16 %v689, %v681
        %v762 = vpack.c.b16 %v698, %v690
        %v763 = vpack.c.b16 %v699, %v691
        %v764 = vpack.c.b16 %v700, %v692
        %v765 = vpack.c.b16 %v701, %v693
        %v766 = vpack.c.b16 %v702, %v694
        %v767 = vpack.c.b16 %v703, %v695
        %v768 = vpack.c.b16 %v704, %v696
        %v769 = vpack.c.b16 %v705, %v697
        %v770 = vpack.c.b16 %v714, %v706
        %v771 = vpack.c.b16 %v715, %v707
        %v772 = vpack.c.b16 %v716, %v708
        %v773 = vpack.c.b16 %v717, %v709
        %v774 = vpack.c.b16 %v718, %v710
        %v775 = vpack.c.b16 %v719, %v711
        %v776 = vpack.c.b16 %v720, %v712
        %v777 = vpack.c.b16 %v721, %v713
        %vm826 = vcmask 883712
        %v828 = vsel %vm826, %v546, 0
        %v831 = vsel %vm826, %v547, 0
        %v834 = vsel %vm826, %v548, 0
        %v837 = vsel %vm826, %v549, 0
        %v840 = vsel %vm826, %v550, 0
        %v843 = vsel %vm826, %v551, 0
        %v846 = vsel %vm826, %v552, 0
        %v849 = vsel %vm826, %v553, 0
        %vm851 = vcmask 1045504
        %v853 = vsel %vm851, %v770, 0
        %v856 = vsel %vm851, %v771, 0
        %v859 = vsel %vm851, %v772, 0
        %v862 = vsel %vm851, %v773, 0
        %v865 = vsel %vm851, %v774, 0
        %v868 = vsel %vm851, %v775, 0
        %v871 = vsel %vm851, %v776, 0
        %v874 = vsel %vm851, %v777, 0
        %876 = vmatpush.bf16.msra.mxu0 0
        %877 = vmatpush.bf16.msra.mxu0 %v853
        %878 = vmatpush.bf16.msra.mxu0 %v762
        %879 = vmatpush.bf16.msra.mxu0 %v754
        %880 = vmatpush.bf16.msra.mxu0 %v746
        %881 = vmatpush.bf16.msra.mxu0 %v738
        %882 = vmatpush.bf16.msra.mxu0 %v730
        %883 = vmatpush.bf16.msra.mxu0 %v722
        %884 = vmatmul.bf16.gmra.mxu0 %v828
        %v885 = vpop.f32.mrf.mxu0
        %v886 = vadd.f32 %v437, %v885
        %v887 = vpop.f32.mrf.mxu0
        %v888 = vadd.f32 %v442, %v887
        %889 = vmatmul.bf16.gmra.mxu0 %v831
        %v890 = vpop.f32.mrf.mxu0
        %v891 = vadd.f32 %v447, %v890
        %v892 = vpop.f32.mrf.mxu0
        %v893 = vadd.f32 %v452, %v892
        %894 = vmatmul.bf16.gmra.mxu0 %v834
        %v895 = vpop.f32.mrf.mxu0
        %v896 = vadd.f32 %v457, %v895
        %v897 = vpop.f32.mrf.mxu0
        %v898 = vadd.f32 %v462, %v897
        %899 = vmatmul.bf16.gmra.mxu0 %v837
        %v900 = vpop.f32.mrf.mxu0
        %v901 = vadd.f32 %v467, %v900
        %v902 = vpop.f32.mrf.mxu0
        %v903 = vadd.f32 %v472, %v902
        %904 = vmatmul.bf16.gmra.mxu0 %v840
        %v905 = vpop.f32.mrf.mxu0
        %v906 = vadd.f32 %v477, %v905
        %v907 = vpop.f32.mrf.mxu0
        %v908 = vadd.f32 %v482, %v907
        %909 = vmatmul.bf16.gmra.mxu0 %v843
        %v910 = vpop.f32.mrf.mxu0
        %v911 = vadd.f32 %v487, %v910
        %v912 = vpop.f32.mrf.mxu0
        %v913 = vadd.f32 %v492, %v912
        %914 = vmatmul.bf16.gmra.mxu0 %v846
        %v915 = vpop.f32.mrf.mxu0
        %v916 = vadd.f32 %v497, %v915
        %v917 = vpop.f32.mrf.mxu0
        %v918 = vadd.f32 %v502, %v917
        %919 = vmatmul.bf16.gmra.mxu0 %v849
        %v920 = vpop.f32.mrf.mxu0
        %v921 = vadd.f32 %v507, %v920
        %v922 = vpop.f32.mrf.mxu0
        %v923 = vadd.f32 %v512, %v922
        %924 = vdwg.mxu0
        %925 = vmatpush.bf16.msra.mxu0 0
        %926 = vmatpush.bf16.msra.mxu0 %v856
        %927 = vmatpush.bf16.msra.mxu0 %v763
        %928 = vmatpush.bf16.msra.mxu0 %v755
        %929 = vmatpush.bf16.msra.mxu0 %v747
        %930 = vmatpush.bf16.msra.mxu0 %v739
        %931 = vmatpush.bf16.msra.mxu0 %v731
        %932 = vmatpush.bf16.msra.mxu0 %v723
        %933 = vmatmul.bf16.gmra.mxu0 %v828
        %v934 = vpop.f32.mrf.mxu0
        %v935 = vadd.f32 %v437, %v934
        %v936 = vpop.f32.mrf.mxu0
        %v937 = vadd.f32 %v442, %v936
        %938 = vmatmul.bf16.gmra.mxu0 %v831
        %v939 = vpop.f32.mrf.mxu0
        %v940 = vadd.f32 %v447, %v939
        %v941 = vpop.f32.mrf.mxu0
        %v942 = vadd.f32 %v452, %v941
        %943 = vmatmul.bf16.gmra.mxu0 %v834
        %v944 = vpop.f32.mrf.mxu0
        %v945 = vadd.f32 %v457, %v944
        %v946 = vpop.f32.mrf.mxu0
        %v947 = vadd.f32 %v462, %v946
        %948 = vmatmul.bf16.gmra.mxu0 %v837
        %v949 = vpop.f32.mrf.mxu0
        %v950 = vadd.f32 %v467, %v949
        %v951 = vpop.f32.mrf.mxu0
        %v952 = vadd.f32 %v472, %v951
        %953 = vmatmul.bf16.gmra.mxu0 %v840
        %v954 = vpop.f32.mrf.mxu0
        %v955 = vadd.f32 %v477, %v954
        %v956 = vpop.f32.mrf.mxu0
        %v957 = vadd.f32 %v482, %v956
        %958 = vmatmul.bf16.gmra.mxu0 %v843
        %v959 = vpop.f32.mrf.mxu0
        %v960 = vadd.f32 %v487, %v959
        %v961 = vpop.f32.mrf.mxu0
        %v962 = vadd.f32 %v492, %v961
        %963 = vmatmul.bf16.gmra.mxu0 %v846
        %v964 = vpop.f32.mrf.mxu0
        %v965 = vadd.f32 %v497, %v964
        %v966 = vpop.f32.mrf.mxu0
        %v967 = vadd.f32 %v502, %v966
        %968 = vmatmul.bf16.gmra.mxu0 %v849
        %v969 = vpop.f32.mrf.mxu0
        %v970 = vadd.f32 %v507, %v969
        %v971 = vpop.f32.mrf.mxu0
        %v972 = vadd.f32 %v512, %v971
        %973 = vdwg.mxu0
        %974 = vmatpush.bf16.msra.mxu0 0
        %975 = vmatpush.bf16.msra.mxu0 %v859
        %976 = vmatpush.bf16.msra.mxu0 %v764
        %977 = vmatpush.bf16.msra.mxu0 %v756
        %978 = vmatpush.bf16.msra.mxu0 %v748
        %979 = vmatpush.bf16.msra.mxu0 %v740
        %980 = vmatpush.bf16.msra.mxu0 %v732
        %981 = vmatpush.bf16.msra.mxu0 %v724
        %982 = vmatmul.bf16.gmra.mxu0 %v828
        %v983 = vpop.f32.mrf.mxu0
        %v984 = vadd.f32 %v437, %v983
        %v985 = vpop.f32.mrf.mxu0
        %v986 = vadd.f32 %v442, %v985
        %987 = vmatmul.bf16.gmra.mxu0 %v831
        %v988 = vpop.f32.mrf.mxu0
        %v989 = vadd.f32 %v447, %v988
        %v990 = vpop.f32.mrf.mxu0
        %v991 = vadd.f32 %v452, %v990
        %992 = vmatmul.bf16.gmra.mxu0 %v834
        %v993 = vpop.f32.mrf.mxu0
        %v994 = vadd.f32 %v457, %v993
        %v995 = vpop.f32.mrf.mxu0
        %v996 = vadd.f32 %v462, %v995
        %997 = vmatmul.bf16.gmra.mxu0 %v837
        %v998 = vpop.f32.mrf.mxu0
        %v999 = vadd.f32 %v467, %v998
        %v1000 = vpop.f32.mrf.mxu0
        %v1001 = vadd.f32 %v472, %v1000
        %1002 = vmatmul.bf16.gmra.mxu0 %v840
        %v1003 = vpop.f32.mrf.mxu0
        %v1004 = vadd.f32 %v477, %v1003
        %v1005 = vpop.f32.mrf.mxu0
        %v1006 = vadd.f32 %v482, %v1005
        %1007 = vmatmul.bf16.gmra.mxu0 %v843
        %v1008 = vpop.f32.mrf.mxu0
        %v1009 = vadd.f32 %v487, %v1008
        %v1010 = vpop.f32.mrf.mxu0
        %v1011 = vadd.f32 %v492, %v1010
        %1012 = vmatmul.bf16.gmra.mxu0 %v846
        %v1013 = vpop.f32.mrf.mxu0
        %v1014 = vadd.f32 %v497, %v1013
        %v1015 = vpop.f32.mrf.mxu0
        %v1016 = vadd.f32 %v502, %v1015
        %1017 = vmatmul.bf16.gmra.mxu0 %v849
        %v1018 = vpop.f32.mrf.mxu0
        %v1019 = vadd.f32 %v507, %v1018
        %v1020 = vpop.f32.mrf.mxu0
        %v1021 = vadd.f32 %v512, %v1020
        %1022 = vdwg.mxu0
        %1023 = vmatpush.bf16.msra.mxu0 0
        %1024 = vmatpush.bf16.msra.mxu0 %v862
        %1025 = vmatpush.bf16.msra.mxu0 %v765
        %1026 = vmatpush.bf16.msra.mxu0 %v757
        %1027 = vmatpush.bf16.msra.mxu0 %v749
        %1028 = vmatpush.bf16.msra.mxu0 %v741
        %1029 = vmatpush.bf16.msra.mxu0 %v733
        %1030 = vmatpush.bf16.msra.mxu0 %v725
        %1031 = vmatmul.bf16.gmra.mxu0 %v828
        %v1032 = vpop.f32.mrf.mxu0
        %v1033 = vadd.f32 %v437, %v1032
        %v1034 = vpop.f32.mrf.mxu0
        %v1035 = vadd.f32 %v442, %v1034
        %1036 = vmatmul.bf16.gmra.mxu0 %v831
        %v1037 = vpop.f32.mrf.mxu0
        %v1038 = vadd.f32 %v447, %v1037
        %v1039 = vpop.f32.mrf.mxu0
        %v1040 = vadd.f32 %v452, %v1039
        %1041 = vmatmul.bf16.gmra.mxu0 %v834
        %v1042 = vpop.f32.mrf.mxu0
        %v1043 = vadd.f32 %v457, %v1042
        %v1044 = vpop.f32.mrf.mxu0
        %v1045 = vadd.f32 %v462, %v1044
        %1046 = vmatmul.bf16.gmra.mxu0 %v837
        %v1047 = vpop.f32.mrf.mxu0
        %v1048 = vadd.f32 %v467, %v1047
        %v1049 = vpop.f32.mrf.mxu0
        %v1050 = vadd.f32 %v472, %v1049
        %1051 = vmatmul.bf16.gmra.mxu0 %v840
        %v1052 = vpop.f32.mrf.mxu0
        %v1053 = vadd.f32 %v477, %v1052
        %v1054 = vpop.f32.mrf.mxu0
        %v1055 = vadd.f32 %v482, %v1054
        %1056 = vmatmul.bf16.gmra.mxu0 %v843
        %v1057 = vpop.f32.mrf.mxu0
        %v1058 = vadd.f32 %v487, %v1057
        %v1059 = vpop.f32.mrf.mxu0
        %v1060 = vadd.f32 %v492, %v1059
        %1061 = vmatmul.bf16.gmra.mxu0 %v846
        %v1062 = vpop.f32.mrf.mxu0
        %v1063 = vadd.f32 %v497, %v1062
        %v1064 = vpop.f32.mrf.mxu0
        %v1065 = vadd.f32 %v502, %v1064
        %1066 = vmatmul.bf16.gmra.mxu0 %v849
        %v1067 = vpop.f32.mrf.mxu0
        %v1068 = vadd.f32 %v507, %v1067
        %v1069 = vpop.f32.mrf.mxu0
        %v1070 = vadd.f32 %v512, %v1069
        %1071 = vdwg.mxu0
        %1072 = vmatpush.bf16.msra.mxu0 0
        %1073 = vmatpush.bf16.msra.mxu0 %v865
        %1074 = vmatpush.bf16.msra.mxu0 %v766
        %1075 = vmatpush.bf16.msra.mxu0 %v758
        %1076 = vmatpush.bf16.msra.mxu0 %v750
        %1077 = vmatpush.bf16.msra.mxu0 %v742
        %1078 = vmatpush.bf16.msra.mxu0 %v734
        %1079 = vmatpush.bf16.msra.mxu0 %v726
        %1080 = vmatmul.bf16.gmra.mxu0 %v828
        %v1081 = vpop.f32.mrf.mxu0
        %v1082 = vadd.f32 %v437, %v1081
        %v1083 = vpop.f32.mrf.mxu0
        %v1084 = vadd.f32 %v442, %v1083
        %1085 = vmatmul.bf16.gmra.mxu0 %v831
        %v1086 = vpop.f32.mrf.mxu0
        %v1087 = vadd.f32 %v447, %v1086
        %v1088 = vpop.f32.mrf.mxu0
        %v1089 = vadd.f32 %v452, %v1088
        %1090 = vmatmul.bf16.gmra.mxu0 %v834
        %v1091 = vpop.f32.mrf.mxu0
        %v1092 = vadd.f32 %v457, %v1091
        %v1093 = vpop.f32.mrf.mxu0
        %v1094 = vadd.f32 %v462, %v1093
        %1095 = vmatmul.bf16.gmra.mxu0 %v837
        %v1096 = vpop.f32.mrf.mxu0
        %v1097 = vadd.f32 %v467, %v1096
        %v1098 = vpop.f32.mrf.mxu0
        %v1099 = vadd.f32 %v472, %v1098
        %1100 = vmatmul.bf16.gmra.mxu0 %v840
        %v1101 = vpop.f32.mrf.mxu0
        %v1102 = vadd.f32 %v477, %v1101
        %v1103 = vpop.f32.mrf.mxu0
        %v1104 = vadd.f32 %v482, %v1103
        %1105 = vmatmul.bf16.gmra.mxu0 %v843
        %v1106 = vpop.f32.mrf.mxu0
        %v1107 = vadd.f32 %v487, %v1106
        %v1108 = vpop.f32.mrf.mxu0
        %v1109 = vadd.f32 %v492, %v1108
        %1110 = vmatmul.bf16.gmra.mxu0 %v846
        %v1111 = vpop.f32.mrf.mxu0
        %v1112 = vadd.f32 %v497, %v1111
        %v1113 = vpop.f32.mrf.mxu0
        %v1114 = vadd.f32 %v502, %v1113
        %1115 = vmatmul.bf16.gmra.mxu0 %v849
        %v1116 = vpop.f32.mrf.mxu0
        %v1117 = vadd.f32 %v507, %v1116
        %v1118 = vpop.f32.mrf.mxu0
        %v1119 = vadd.f32 %v512, %v1118
        %1120 = vdwg.mxu0
        %1121 = vmatpush.bf16.msra.mxu0 0
        %1122 = vmatpush.bf16.msra.mxu0 %v868
        %1123 = vmatpush.bf16.msra.mxu0 %v767
        %1124 = vmatpush.bf16.msra.mxu0 %v759
        %1125 = vmatpush.bf16.msra.mxu0 %v751
        %1126 = vmatpush.bf16.msra.mxu0 %v743
        %1127 = vmatpush.bf16.msra.mxu0 %v735
        %1128 = vmatpush.bf16.msra.mxu0 %v727
        %1129 = vmatmul.bf16.gmra.mxu0 %v828
        %v1130 = vpop.f32.mrf.mxu0
        %v1131 = vadd.f32 %v437, %v1130
        %v1132 = vpop.f32.mrf.mxu0
        %v1133 = vadd.f32 %v442, %v1132
        %1134 = vmatmul.bf16.gmra.mxu0 %v831
        %v1135 = vpop.f32.mrf.mxu0
        %v1136 = vadd.f32 %v447, %v1135
        %v1137 = vpop.f32.mrf.mxu0
        %v1138 = vadd.f32 %v452, %v1137
        %1139 = vmatmul.bf16.gmra.mxu0 %v834
        %v1140 = vpop.f32.mrf.mxu0
        %v1141 = vadd.f32 %v457, %v1140
        %v1142 = vpop.f32.mrf.mxu0
        %v1143 = vadd.f32 %v462, %v1142
        %1144 = vmatmul.bf16.gmra.mxu0 %v837
        %v1145 = vpop.f32.mrf.mxu0
        %v1146 = vadd.f32 %v467, %v1145
        %v1147 = vpop.f32.mrf.mxu0
        %v1148 = vadd.f32 %v472, %v1147
        %1149 = vmatmul.bf16.gmra.mxu0 %v840
        %v1150 = vpop.f32.mrf.mxu0
        %v1151 = vadd.f32 %v477, %v1150
        %v1152 = vpop.f32.mrf.mxu0
        %v1153 = vadd.f32 %v482, %v1152
        %1154 = vmatmul.bf16.gmra.mxu0 %v843
        %v1155 = vpop.f32.mrf.mxu0
        %v1156 = vadd.f32 %v487, %v1155
        %v1157 = vpop.f32.mrf.mxu0
        %v1158 = vadd.f32 %v492, %v1157
        %1159 = vmatmul.bf16.gmra.mxu0 %v846
        %v1160 = vpop.f32.mrf.mxu0
        %v1161 = vadd.f32 %v497, %v1160
        %v1162 = vpop.f32.mrf.mxu0
        %v1163 = vadd.f32 %v502, %v1162
        %1164 = vmatmul.bf16.gmra.mxu0 %v849
        %v1165 = vpop.f32.mrf.mxu0
        %v1166 = vadd.f32 %v507, %v1165
        %v1167 = vpop.f32.mrf.mxu0
        %v1168 = vadd.f32 %v512, %v1167
        %1169 = vdwg.mxu0
        %1170 = vmatpush.bf16.msra.mxu0 0
        %1171 = vmatpush.bf16.msra.mxu0 %v871
        %1172 = vmatpush.bf16.msra.mxu0 %v768
        %1173 = vmatpush.bf16.msra.mxu0 %v760
        %1174 = vmatpush.bf16.msra.mxu0 %v752
        %1175 = vmatpush.bf16.msra.mxu0 %v744
        %1176 = vmatpush.bf16.msra.mxu0 %v736
        %1177 = vmatpush.bf16.msra.mxu0 %v728
        %1178 = vmatmul.bf16.gmra.mxu0 %v828
        %v1179 = vpop.f32.mrf.mxu0
        %v1180 = vadd.f32 %v437, %v1179
        %v1181 = vpop.f32.mrf.mxu0
        %v1182 = vadd.f32 %v442, %v1181
        %1183 = vmatmul.bf16.gmra.mxu0 %v831
        %v1184 = vpop.f32.mrf.mxu0
        %v1185 = vadd.f32 %v447, %v1184
        %v1186 = vpop.f32.mrf.mxu0
        %v1187 = vadd.f32 %v452, %v1186
        %1188 = vmatmul.bf16.gmra.mxu0 %v834
        %v1189 = vpop.f32.mrf.mxu0
        %v1190 = vadd.f32 %v457, %v1189
        %v1191 = vpop.f32.mrf.mxu0
        %v1192 = vadd.f32 %v462, %v1191
        %1193 = vmatmul.bf16.gmra.mxu0 %v837
        %v1194 = vpop.f32.mrf.mxu0
        %v1195 = vadd.f32 %v467, %v1194
        %v1196 = vpop.f32.mrf.mxu0
        %v1197 = vadd.f32 %v472, %v1196
        %1198 = vmatmul.bf16.gmra.mxu0 %v840
        %v1199 = vpop.f32.mrf.mxu0
        %v1200 = vadd.f32 %v477, %v1199
        %v1201 = vpop.f32.mrf.mxu0
        %v1202 = vadd.f32 %v482, %v1201
        %1203 = vmatmul.bf16.gmra.mxu0 %v843
        %v1204 = vpop.f32.mrf.mxu0
        %v1205 = vadd.f32 %v487, %v1204
        %v1206 = vpop.f32.mrf.mxu0
        %v1207 = vadd.f32 %v492, %v1206
        %1208 = vmatmul.bf16.gmra.mxu0 %v846
        %v1209 = vpop.f32.mrf.mxu0
        %v1210 = vadd.f32 %v497, %v1209
        %v1211 = vpop.f32.mrf.mxu0
        %v1212 = vadd.f32 %v502, %v1211
        %1213 = vmatmul.bf16.gmra.mxu0 %v849
        %v1214 = vpop.f32.mrf.mxu0
        %v1215 = vadd.f32 %v507, %v1214
        %v1216 = vpop.f32.mrf.mxu0
        %v1217 = vadd.f32 %v512, %v1216
        %1218 = vdwg.mxu0
        %1219 = vmatpush.bf16.msra.mxu0 0
        %1220 = vmatpush.bf16.msra.mxu0 %v874
        %1221 = vmatpush.bf16.msra.mxu0 %v769
        %1222 = vmatpush.bf16.msra.mxu0 %v761
        %1223 = vmatpush.bf16.msra.mxu0 %v753
        %1224 = vmatpush.bf16.msra.mxu0 %v745
        %1225 = vmatpush.bf16.msra.mxu0 %v737
        %1226 = vmatpush.bf16.msra.mxu0 %v729
        %1227 = vmatmul.bf16.gmra.mxu0 %v828
        %v1228 = vpop.f32.mrf.mxu0
        %v1229 = vadd.f32 %v437, %v1228
        %v1230 = vpop.f32.mrf.mxu0
        %v1231 = vadd.f32 %v442, %v1230
        %1232 = vmatmul.bf16.gmra.mxu0 %v831
        %v1233 = vpop.f32.mrf.mxu0
        %v1234 = vadd.f32 %v447, %v1233
        %v1235 = vpop.f32.mrf.mxu0
        %v1236 = vadd.f32 %v452, %v1235
        %1237 = vmatmul.bf16.gmra.mxu0 %v834
        %v1238 = vpop.f32.mrf.mxu0
        %v1239 = vadd.f32 %v457, %v1238
        %v1240 = vpop.f32.mrf.mxu0
        %v1241 = vadd.f32 %v462, %v1240
        %1242 = vmatmul.bf16.gmra.mxu0 %v837
        %v1243 = vpop.f32.mrf.mxu0
        %v1244 = vadd.f32 %v467, %v1243
        %v1245 = vpop.f32.mrf.mxu0
        %v1246 = vadd.f32 %v472, %v1245
        %1247 = vmatmul.bf16.gmra.mxu0 %v840
        %v1248 = vpop.f32.mrf.mxu0
        %v1249 = vadd.f32 %v477, %v1248
        %v1250 = vpop.f32.mrf.mxu0
        %v1251 = vadd.f32 %v482, %v1250
        %1252 = vmatmul.bf16.gmra.mxu0 %v843
        %v1253 = vpop.f32.mrf.mxu0
        %v1254 = vadd.f32 %v487, %v1253
        %v1255 = vpop.f32.mrf.mxu0
        %v1256 = vadd.f32 %v492, %v1255
        %1257 = vmatmul.bf16.gmra.mxu0 %v846
        %v1258 = vpop.f32.mrf.mxu0
        %v1259 = vadd.f32 %v497, %v1258
        %v1260 = vpop.f32.mrf.mxu0
        %v1261 = vadd.f32 %v502, %v1260
        %1262 = vmatmul.bf16.gmra.mxu0 %v849
        %v1263 = vpop.f32.mrf.mxu0
        %v1264 = vadd.f32 %v507, %v1263
        %v1265 = vpop.f32.mrf.mxu0
        %v1266 = vadd.f32 %v512, %v1265
        %1267 = vdwg.mxu0
        %1268 = vst [vmem:[%s337] sm:$0xff] %v886
        %1269 = vst [vmem:[%s337 + $0x8] sm:$0xff] %v935
        %1270 = vst [vmem:[%s337 + $0x10] sm:$0xff] %v984
        %1271 = vst [vmem:[%s337 + $0x18] sm:$0xff] %v1033
        %1272 = vst [vmem:[%s337 + $0x20] sm:$0xff] %v1082
        %1273 = vst [vmem:[%s337 + $0x28] sm:$0xff] %v1131
        %1274 = vst [vmem:[%s337 + $0x30] sm:$0xff] %v1180
        %1275 = vst [vmem:[%s337 + $0x38] sm:$0xff] %v1229
        %1276 = vst [vmem:[%s337 + $0x40] sm:$0xff] %v888
        %1277 = vst [vmem:[%s337 + $0x48] sm:$0xff] %v937
        %1278 = vst [vmem:[%s337 + $0x50] sm:$0xff] %v986
        %1279 = vst [vmem:[%s337 + $0x58] sm:$0xff] %v1035
        %1280 = vst [vmem:[%s337 + $0x60] sm:$0xff] %v1084
        %1281 = vst [vmem:[%s337 + $0x68] sm:$0xff] %v1133
        %1282 = vst [vmem:[%s337 + $0x70] sm:$0xff] %v1182
        %1283 = vst [vmem:[%s337 + $0x78] sm:$0xff] %v1231
        %1284 = vst [vmem:[%s337 + $0x80] sm:$0xff] %v891
        %1285 = vst [vmem:[%s337 + $0x88] sm:$0xff] %v940
        %1286 = vst [vmem:[%s337 + $0x90] sm:$0xff] %v989
        %1287 = vst [vmem:[%s337 + $0x98] sm:$0xff] %v1038
        %1288 = vst [vmem:[%s337 + $0xa0] sm:$0xff] %v1087
        %1289 = vst [vmem:[%s337 + $0xa8] sm:$0xff] %v1136
        %1290 = vst [vmem:[%s337 + $0xb0] sm:$0xff] %v1185
        %1291 = vst [vmem:[%s337 + $0xb8] sm:$0xff] %v1234
        %1292 = vst [vmem:[%s337 + $0xc0] sm:$0xff] %v893
        %1293 = vst [vmem:[%s337 + $0xc8] sm:$0xff] %v942
        %1294 = vst [vmem:[%s337 + $0xd0] sm:$0xff] %v991
        %1295 = vst [vmem:[%s337 + $0xd8] sm:$0xff] %v1040
        %1296 = vst [vmem:[%s337 + $0xe0] sm:$0xff] %v1089
        %1297 = vst [vmem:[%s337 + $0xe8] sm:$0xff] %v1138
        %1298 = vst [vmem:[%s337 + $0xf0] sm:$0xff] %v1187
        %1299 = vst [vmem:[%s337 + $0xf8] sm:$0xff] %v1236
        %1300 = vst [vmem:[%s337 + $0x100] sm:$0xff] %v896
        %1301 = vst [vmem:[%s337 + $0x108] sm:$0xff] %v945
        %1302 = vst [vmem:[%s337 + $0x110] sm:$0xff] %v994
        %1303 = vst [vmem:[%s337 + $0x118] sm:$0xff] %v1043
        %1304 = vst [vmem:[%s337 + $0x120] sm:$0xff] %v1092
        %1305 = vst [vmem:[%s337 + $0x128] sm:$0xff] %v1141
        %1306 = vst [vmem:[%s337 + $0x130] sm:$0xff] %v1190
        %1307 = vst [vmem:[%s337 + $0x138] sm:$0xff] %v1239
        %1308 = vst [vmem:[%s337 + $0x140] sm:$0xff] %v898
        %1309 = vst [vmem:[%s337 + $0x148] sm:$0xff] %v947
        %1310 = vst [vmem:[%s337 + $0x150] sm:$0xff] %v996
        %1311 = vst [vmem:[%s337 + $0x158] sm:$0xff] %v1045
        %1312 = vst [vmem:[%s337 + $0x160] sm:$0xff] %v1094
        %1313 = vst [vmem:[%s337 + $0x168] sm:$0xff] %v1143
        %1314 = vst [vmem:[%s337 + $0x170] sm:$0xff] %v1192
        %1315 = vst [vmem:[%s337 + $0x178] sm:$0xff] %v1241
        %1316 = vst [vmem:[%s337 + $0x180] sm:$0xff] %v901
        %1317 = vst [vmem:[%s337 + $0x188] sm:$0xff] %v950
        %1318 = vst [vmem:[%s337 + $0x190] sm:$0xff] %v999
        %1319 = vst [vmem:[%s337 + $0x198] sm:$0xff] %v1048
        %1320 = vst [vmem:[%s337 + $0x1a0] sm:$0xff] %v1097
        %1321 = vst [vmem:[%s337 + $0x1a8] sm:$0xff] %v1146
        %1322 = vst [vmem:[%s337 + $0x1b0] sm:$0xff] %v1195
        %1323 = vst [vmem:[%s337 + $0x1b8] sm:$0xff] %v1244
        %1324 = vst [vmem:[%s337 + $0x1c0] sm:$0xff] %v903
        %1325 = vst [vmem:[%s337 + $0x1c8] sm:$0xff] %v952
        %1326 = vst [vmem:[%s337 + $0x1d0] sm:$0xff] %v1001
        %1327 = vst [vmem:[%s337 + $0x1d8] sm:$0xff] %v1050
        %1328 = vst [vmem:[%s337 + $0x1e0] sm:$0xff] %v1099
        %1329 = vst [vmem:[%s337 + $0x1e8] sm:$0xff] %v1148
        %1330 = vst [vmem:[%s337 + $0x1f0] sm:$0xff] %v1197
        %1331 = vst [vmem:[%s337 + $0x1f8] sm:$0xff] %v1246
        %1332 = vst [vmem:[%s337 + $0x200] sm:$0xff] %v906
        %1333 = vst [vmem:[%s337 + $0x208] sm:$0xff] %v955
        %1334 = vst [vmem:[%s337 + $0x210] sm:$0xff] %v1004
        %1335 = vst [vmem:[%s337 + $0x218] sm:$0xff] %v1053
        %1336 = vst [vmem:[%s337 + $0x220] sm:$0xff] %v1102
        %1337 = vst [vmem:[%s337 + $0x228] sm:$0xff] %v1151
        %1338 = vst [vmem:[%s337 + $0x230] sm:$0xff] %v1200
        %1339 = vst [vmem:[%s337 + $0x238] sm:$0xff] %v1249
        %1340 = vst [vmem:[%s337 + $0x240] sm:$0xff] %v908
        %1341 = vst [vmem:[%s337 + $0x248] sm:$0xff] %v957
        %1342 = vst [vmem:[%s337 + $0x250] sm:$0xff] %v1006
        %1343 = vst [vmem:[%s337 + $0x258] sm:$0xff] %v1055
        %1344 = vst [vmem:[%s337 + $0x260] sm:$0xff] %v1104
        %1345 = vst [vmem:[%s337 + $0x268] sm:$0xff] %v1153
        %1346 = vst [vmem:[%s337 + $0x270] sm:$0xff] %v1202
        %1347 = vst [vmem:[%s337 + $0x278] sm:$0xff] %v1251
        %1348 = vst [vmem:[%s337 + $0x280] sm:$0xff] %v911
        %1349 = vst [vmem:[%s337 + $0x288] sm:$0xff] %v960
        %1350 = vst [vmem:[%s337 + $0x290] sm:$0xff] %v1009
        %1351 = vst [vmem:[%s337 + $0x298] sm:$0xff] %v1058
        %1352 = vst [vmem:[%s337 + $0x2a0] sm:$0xff] %v1107
        %1353 = vst [vmem:[%s337 + $0x2a8] sm:$0xff] %v1156
        %1354 = vst [vmem:[%s337 + $0x2b0] sm:$0xff] %v1205
        %1355 = vst [vmem:[%s337 + $0x2b8] sm:$0xff] %v1254
        %1356 = vst [vmem:[%s337 + $0x2c0] sm:$0xff] %v913
        %1357 = vst [vmem:[%s337 + $0x2c8] sm:$0xff] %v962
        %1358 = vst [vmem:[%s337 + $0x2d0] sm:$0xff] %v1011
        %1359 = vst [vmem:[%s337 + $0x2d8] sm:$0xff] %v1060
        %1360 = vst [vmem:[%s337 + $0x2e0] sm:$0xff] %v1109
        %1361 = vst [vmem:[%s337 + $0x2e8] sm:$0xff] %v1158
        %1362 = vst [vmem:[%s337 + $0x2f0] sm:$0xff] %v1207
        %1363 = vst [vmem:[%s337 + $0x2f8] sm:$0xff] %v1256
        %1364 = vst [vmem:[%s337 + $0x300] sm:$0xff] %v916
        %1365 = vst [vmem:[%s337 + $0x308] sm:$0xff] %v965
        %1366 = vst [vmem:[%s337 + $0x310] sm:$0xff] %v1014
        %1367 = vst [vmem:[%s337 + $0x318] sm:$0xff] %v1063
        %1368 = vst [vmem:[%s337 + $0x320] sm:$0xff] %v1112
        %1369 = vst [vmem:[%s337 + $0x328] sm:$0xff] %v1161
        %1370 = vst [vmem:[%s337 + $0x330] sm:$0xff] %v1210
        %1371 = vst [vmem:[%s337 + $0x338] sm:$0xff] %v1259
        %1372 = vst [vmem:[%s337 + $0x340] sm:$0xff] %v918
        %1373 = vst [vmem:[%s337 + $0x348] sm:$0xff] %v967
        %1374 = vst [vmem:[%s337 + $0x350] sm:$0xff] %v1016
        %1375 = vst [vmem:[%s337 + $0x358] sm:$0xff] %v1065
        %1376 = vst [vmem:[%s337 + $0x360] sm:$0xff] %v1114
        %1377 = vst [vmem:[%s337 + $0x368] sm:$0xff] %v1163
        %1378 = vst [vmem:[%s337 + $0x370] sm:$0xff] %v1212
        %1379 = vst [vmem:[%s337 + $0x378] sm:$0xff] %v1261
        %1380 = vst [vmem:[%s337 + $0x380] sm:$0xff] %v921
        %1381 = vst [vmem:[%s337 + $0x388] sm:$0xff] %v970
        %1382 = vst [vmem:[%s337 + $0x390] sm:$0xff] %v1019
        %1383 = vst [vmem:[%s337 + $0x398] sm:$0xff] %v1068
        %1384 = vst [vmem:[%s337 + $0x3a0] sm:$0xff] %v1117
        %1385 = vst [vmem:[%s337 + $0x3a8] sm:$0xff] %v1166
        %1386 = vst [vmem:[%s337 + $0x3b0] sm:$0xff] %v1215
        %1387 = vst [vmem:[%s337 + $0x3b8] sm:$0xff] %v1264
        %1388 = vst [vmem:[%s337 + $0x3c0] sm:$0xff] %v923
        %1389 = vst [vmem:[%s337 + $0x3c8] sm:$0xff] %v972
        %1390 = vst [vmem:[%s337 + $0x3d0] sm:$0xff] %v1021
        %1391 = vst [vmem:[%s337 + $0x3d8] sm:$0xff] %v1070
        %1392 = vst [vmem:[%s337 + $0x3e0] sm:$0xff] %v1119
        %1393 = vst [vmem:[%s337 + $0x3e8] sm:$0xff] %v1168
        %1394 = vst [vmem:[%s337 + $0x3f0] sm:$0xff] %v1217
        %1395 = vst [vmem:[%s337 + $0x3f8] sm:$0xff] %v1266
        %s1396 = sand.u32 %s120, 1
        %s1397 = sand.u32 %s120, 1
        %s1398 = smul.addr %s1397, 1024
        %s1399 = scalar_lea.vmem [#allocation3], %s1398
        // Predicated region
        $region56: #{single_conv3d_block.1} parent=50 // pred_check
          %p1400 = pneg %p130
        $region57: #{single_conv3d_block.1} parent=50 // pred_check_branch
          %1402 = sbr.rel (%p1400) target = $region59
        $region58: #{single_conv3d_block.1} parent=50 // pred_region
          %s1403 = smul.u32 8, %s20
          %s1404 = smul.addr %s19, 256
          %s1405 = sadd.s32 %s1403, %s1404
          %s1406 = smul.addr %s1405, 8
          %s1407 = scalar_lea.vmem %s3, %s1406
          // Predicated region
          $region60: #{single_conv3d_block.1} parent=58 // pred_check
            _
          $region61: #{single_conv3d_block.1} parent=58 // pred_check_branch
            %1409 = sbr.rel (0) target = $region63
          $region62: #{single_conv3d_block.1} parent=58 // pred_region
            // Predicated region
            $region64: #{single_conv3d_block.1} parent=62 // pred_check
              _
            $region65: #{single_conv3d_block.1} parent=62 // pred_check_branch
              %1411 = sbr.rel (0) target = $region67
            $region66: #{single_conv3d_block.1} parent=62 // pred_region
              loop: start=0, step=1, limit=1
              $region68: #{single_conv3d_block.1} parent=66 // loop_pre_header
                _
              $region69: #{single_conv3d_block.1} parent=66 // loop_header
                %s1413 = sphi 0, %s1417
                %p1414 = scmp.ge.s32.totalorder %s1413, 1
                %s1418 = sphi %s1399, %s1399
                %s1419 = sphi %s1407, %s1407
              $region70: #{single_conv3d_block.1} parent=66 // loop_header_branch
                %1416 = sbr.rel (%p1414) target = $region74
              $region71: #{single_conv3d_block.1} parent=66 // loop_body
                %v1420 = vld [vmem:[%s1418] sm:$0xff]
                %1421 = vst [vmem:[%s1419] sm:$0xff] %v1420
                %v1422 = vld [vmem:[%s1418 + $0x8] sm:$0xff]
                %1423 = vst [vmem:[%s1419 + $0x8] sm:$0xff] %v1422
                %v1424 = vld [vmem:[%s1418 + $0x10] sm:$0xff]
                %1425 = vst [vmem:[%s1419 + $0x10] sm:$0xff] %v1424
                %v1426 = vld [vmem:[%s1418 + $0x18] sm:$0xff]
                %1427 = vst [vmem:[%s1419 + $0x18] sm:$0xff] %v1426
                %v1428 = vld [vmem:[%s1418 + $0x20] sm:$0xff]
                %1429 = vst [vmem:[%s1419 + $0x20] sm:$0xff] %v1428
                %v1430 = vld [vmem:[%s1418 + $0x28] sm:$0xff]
                %1431 = vst [vmem:[%s1419 + $0x28] sm:$0xff] %v1430
                %v1432 = vld [vmem:[%s1418 + $0x30] sm:$0xff]
                %1433 = vst [vmem:[%s1419 + $0x30] sm:$0xff] %v1432
                %v1434 = vld [vmem:[%s1418 + $0x38] sm:$0xff]
                %1435 = vst [vmem:[%s1419 + $0x38] sm:$0xff] %v1434
                %v1436 = vld [vmem:[%s1418 + $0x40] sm:$0xff]
                %1437 = vst [vmem:[%s1419 + $0x80] sm:$0xff] %v1436
                %v1438 = vld [vmem:[%s1418 + $0x48] sm:$0xff]
                %1439 = vst [vmem:[%s1419 + $0x88] sm:$0xff] %v1438
                %v1440 = vld [vmem:[%s1418 + $0x50] sm:$0xff]
                %1441 = vst [vmem:[%s1419 + $0x90] sm:$0xff] %v1440
                %v1442 = vld [vmem:[%s1418 + $0x58] sm:$0xff]
                %1443 = vst [vmem:[%s1419 + $0x98] sm:$0xff] %v1442
                %v1444 = vld [vmem:[%s1418 + $0x60] sm:$0xff]
                %1445 = vst [vmem:[%s1419 + $0xa0] sm:$0xff] %v1444
                %v1446 = vld [vmem:[%s1418 + $0x68] sm:$0xff]
                %1447 = vst [vmem:[%s1419 + $0xa8] sm:$0xff] %v1446
                %v1448 = vld [vmem:[%s1418 + $0x70] sm:$0xff]
                %1449 = vst [vmem:[%s1419 + $0xb0] sm:$0xff] %v1448
                %v1450 = vld [vmem:[%s1418 + $0x78] sm:$0xff]
                %1451 = vst [vmem:[%s1419 + $0xb8] sm:$0xff] %v1450
                %v1452 = vld [vmem:[%s1418 + $0x80] sm:$0xff]
                %1453 = vst [vmem:[%s1419 + $0x100] sm:$0xff] %v1452
                %v1454 = vld [vmem:[%s1418 + $0x88] sm:$0xff]
                %1455 = vst [vmem:[%s1419 + $0x108] sm:$0xff] %v1454
                %v1456 = vld [vmem:[%s1418 + $0x90] sm:$0xff]
                %1457 = vst [vmem:[%s1419 + $0x110] sm:$0xff] %v1456
                %v1458 = vld [vmem:[%s1418 + $0x98] sm:$0xff]
                %1459 = vst [vmem:[%s1419 + $0x118] sm:$0xff] %v1458
                %v1460 = vld [vmem:[%s1418 + $0xa0] sm:$0xff]
                %1461 = vst [vmem:[%s1419 + $0x120] sm:$0xff] %v1460
                %v1462 = vld [vmem:[%s1418 + $0xa8] sm:$0xff]
                %1463 = vst [vmem:[%s1419 + $0x128] sm:$0xff] %v1462
                %v1464 = vld [vmem:[%s1418 + $0xb0] sm:$0xff]
                %1465 = vst [vmem:[%s1419 + $0x130] sm:$0xff] %v1464
                %v1466 = vld [vmem:[%s1418 + $0xb8] sm:$0xff]
                %1467 = vst [vmem:[%s1419 + $0x138] sm:$0xff] %v1466
                %v1468 = vld [vmem:[%s1418 + $0xc0] sm:$0xff]
                %1469 = vst [vmem:[%s1419 + $0x180] sm:$0xff] %v1468
                %v1470 = vld [vmem:[%s1418 + $0xc8] sm:$0xff]
                %1471 = vst [vmem:[%s1419 + $0x188] sm:$0xff] %v1470
                %v1472 = vld [vmem:[%s1418 + $0xd0] sm:$0xff]
                %1473 = vst [vmem:[%s1419 + $0x190] sm:$0xff] %v1472
                %v1474 = vld [vmem:[%s1418 + $0xd8] sm:$0xff]
                %1475 = vst [vmem:[%s1419 + $0x198] sm:$0xff] %v1474
                %v1476 = vld [vmem:[%s1418 + $0xe0] sm:$0xff]
                %1477 = vst [vmem:[%s1419 + $0x1a0] sm:$0xff] %v1476
                %v1478 = vld [vmem:[%s1418 + $0xe8] sm:$0xff]
                %1479 = vst [vmem:[%s1419 + $0x1a8] sm:$0xff] %v1478
                %v1480 = vld [vmem:[%s1418 + $0xf0] sm:$0xff]
                %1481 = vst [vmem:[%s1419 + $0x1b0] sm:$0xff] %v1480
                %v1482 = vld [vmem:[%s1418 + $0xf8] sm:$0xff]
                %1483 = vst [vmem:[%s1419 + $0x1b8] sm:$0xff] %v1482
                %v1484 = vld [vmem:[%s1418 + $0x100] sm:$0xff]
                %1485 = vst [vmem:[%s1419 + $0x200] sm:$0xff] %v1484
                %v1486 = vld [vmem:[%s1418 + $0x108] sm:$0xff]
                %1487 = vst [vmem:[%s1419 + $0x208] sm:$0xff] %v1486
                %v1488 = vld [vmem:[%s1418 + $0x110] sm:$0xff]
                %1489 = vst [vmem:[%s1419 + $0x210] sm:$0xff] %v1488
                %v1490 = vld [vmem:[%s1418 + $0x118] sm:$0xff]
                %1491 = vst [vmem:[%s1419 + $0x218] sm:$0xff] %v1490
                %v1492 = vld [vmem:[%s1418 + $0x120] sm:$0xff]
                %1493 = vst [vmem:[%s1419 + $0x220] sm:$0xff] %v1492
                %v1494 = vld [vmem:[%s1418 + $0x128] sm:$0xff]
                %1495 = vst [vmem:[%s1419 + $0x228] sm:$0xff] %v1494
                %v1496 = vld [vmem:[%s1418 + $0x130] sm:$0xff]
                %1497 = vst [vmem:[%s1419 + $0x230] sm:$0xff] %v1496
                %v1498 = vld [vmem:[%s1418 + $0x138] sm:$0xff]
                %1499 = vst [vmem:[%s1419 + $0x238] sm:$0xff] %v1498
                %v1500 = vld [vmem:[%s1418 + $0x140] sm:$0xff]
                %1501 = vst [vmem:[%s1419 + $0x280] sm:$0xff] %v1500
                %v1502 = vld [vmem:[%s1418 + $0x148] sm:$0xff]
                %1503 = vst [vmem:[%s1419 + $0x288] sm:$0xff] %v1502
                %v1504 = vld [vmem:[%s1418 + $0x150] sm:$0xff]
                %1505 = vst [vmem:[%s1419 + $0x290] sm:$0xff] %v1504
                %v1506 = vld [vmem:[%s1418 + $0x158] sm:$0xff]
                %1507 = vst [vmem:[%s1419 + $0x298] sm:$0xff] %v1506
                %v1508 = vld [vmem:[%s1418 + $0x160] sm:$0xff]
                %1509 = vst [vmem:[%s1419 + $0x2a0] sm:$0xff] %v1508
                %v1510 = vld [vmem:[%s1418 + $0x168] sm:$0xff]
                %1511 = vst [vmem:[%s1419 + $0x2a8] sm:$0xff] %v1510
                %v1512 = vld [vmem:[%s1418 + $0x170] sm:$0xff]
                %1513 = vst [vmem:[%s1419 + $0x2b0] sm:$0xff] %v1512
                %v1514 = vld [vmem:[%s1418 + $0x178] sm:$0xff]
                %1515 = vst [vmem:[%s1419 + $0x2b8] sm:$0xff] %v1514
                %v1516 = vld [vmem:[%s1418 + $0x180] sm:$0xff]
                %1517 = vst [vmem:[%s1419 + $0x300] sm:$0xff] %v1516
                %v1518 = vld [vmem:[%s1418 + $0x188] sm:$0xff]
                %1519 = vst [vmem:[%s1419 + $0x308] sm:$0xff] %v1518
                %v1520 = vld [vmem:[%s1418 + $0x190] sm:$0xff]
                %1521 = vst [vmem:[%s1419 + $0x310] sm:$0xff] %v1520
                %v1522 = vld [vmem:[%s1418 + $0x198] sm:$0xff]
                %1523 = vst [vmem:[%s1419 + $0x318] sm:$0xff] %v1522
                %v1524 = vld [vmem:[%s1418 + $0x1a0] sm:$0xff]
                %1525 = vst [vmem:[%s1419 + $0x320] sm:$0xff] %v1524
                %v1526 = vld [vmem:[%s1418 + $0x1a8] sm:$0xff]
                %1527 = vst [vmem:[%s1419 + $0x328] sm:$0xff] %v1526
                %v1528 = vld [vmem:[%s1418 + $0x1b0] sm:$0xff]
                %1529 = vst [vmem:[%s1419 + $0x330] sm:$0xff] %v1528
                %v1530 = vld [vmem:[%s1418 + $0x1b8] sm:$0xff]
                %1531 = vst [vmem:[%s1419 + $0x338] sm:$0xff] %v1530
                %v1532 = vld [vmem:[%s1418 + $0x1c0] sm:$0xff]
                %1533 = vst [vmem:[%s1419 + $0x380] sm:$0xff] %v1532
                %v1534 = vld [vmem:[%s1418 + $0x1c8] sm:$0xff]
                %1535 = vst [vmem:[%s1419 + $0x388] sm:$0xff] %v1534
                %v1536 = vld [vmem:[%s1418 + $0x1d0] sm:$0xff]
                %1537 = vst [vmem:[%s1419 + $0x390] sm:$0xff] %v1536
                %v1538 = vld [vmem:[%s1418 + $0x1d8] sm:$0xff]
                %1539 = vst [vmem:[%s1419 + $0x398] sm:$0xff] %v1538
                %v1540 = vld [vmem:[%s1418 + $0x1e0] sm:$0xff]
                %1541 = vst [vmem:[%s1419 + $0x3a0] sm:$0xff] %v1540
                %v1542 = vld [vmem:[%s1418 + $0x1e8] sm:$0xff]
                %1543 = vst [vmem:[%s1419 + $0x3a8] sm:$0xff] %v1542
                %v1544 = vld [vmem:[%s1418 + $0x1f0] sm:$0xff]
                %1545 = vst [vmem:[%s1419 + $0x3b0] sm:$0xff] %v1544
                %v1546 = vld [vmem:[%s1418 + $0x1f8] sm:$0xff]
                %1547 = vst [vmem:[%s1419 + $0x3b8] sm:$0xff] %v1546
                %v1548 = vld [vmem:[%s1418 + $0x200] sm:$0xff]
                %1549 = vst [vmem:[%s1419 + $0x400] sm:$0xff] %v1548
                %v1550 = vld [vmem:[%s1418 + $0x208] sm:$0xff]
                %1551 = vst [vmem:[%s1419 + $0x408] sm:$0xff] %v1550
                %v1552 = vld [vmem:[%s1418 + $0x210] sm:$0xff]
                %1553 = vst [vmem:[%s1419 + $0x410] sm:$0xff] %v1552
                %v1554 = vld [vmem:[%s1418 + $0x218] sm:$0xff]
                %1555 = vst [vmem:[%s1419 + $0x418] sm:$0xff] %v1554
                %v1556 = vld [vmem:[%s1418 + $0x220] sm:$0xff]
                %1557 = vst [vmem:[%s1419 + $0x420] sm:$0xff] %v1556
                %v1558 = vld [vmem:[%s1418 + $0x228] sm:$0xff]
                %1559 = vst [vmem:[%s1419 + $0x428] sm:$0xff] %v1558
                %v1560 = vld [vmem:[%s1418 + $0x230] sm:$0xff]
                %1561 = vst [vmem:[%s1419 + $0x430] sm:$0xff] %v1560
                %v1562 = vld [vmem:[%s1418 + $0x238] sm:$0xff]
                %1563 = vst [vmem:[%s1419 + $0x438] sm:$0xff] %v1562
                %v1564 = vld [vmem:[%s1418 + $0x240] sm:$0xff]
                %1565 = vst [vmem:[%s1419 + $0x480] sm:$0xff] %v1564
                %v1566 = vld [vmem:[%s1418 + $0x248] sm:$0xff]
                %1567 = vst [vmem:[%s1419 + $0x488] sm:$0xff] %v1566
                %v1568 = vld [vmem:[%s1418 + $0x250] sm:$0xff]
                %1569 = vst [vmem:[%s1419 + $0x490] sm:$0xff] %v1568
                %v1570 = vld [vmem:[%s1418 + $0x258] sm:$0xff]
                %1571 = vst [vmem:[%s1419 + $0x498] sm:$0xff] %v1570
                %v1572 = vld [vmem:[%s1418 + $0x260] sm:$0xff]
                %1573 = vst [vmem:[%s1419 + $0x4a0] sm:$0xff] %v1572
                %v1574 = vld [vmem:[%s1418 + $0x268] sm:$0xff]
                %1575 = vst [vmem:[%s1419 + $0x4a8] sm:$0xff] %v1574
                %v1576 = vld [vmem:[%s1418 + $0x270] sm:$0xff]
                %1577 = vst [vmem:[%s1419 + $0x4b0] sm:$0xff] %v1576
                %v1578 = vld [vmem:[%s1418 + $0x278] sm:$0xff]
                %1579 = vst [vmem:[%s1419 + $0x4b8] sm:$0xff] %v1578
                %v1580 = vld [vmem:[%s1418 + $0x280] sm:$0xff]
                %1581 = vst [vmem:[%s1419 + $0x500] sm:$0xff] %v1580
                %v1582 = vld [vmem:[%s1418 + $0x288] sm:$0xff]
                %1583 = vst [vmem:[%s1419 + $0x508] sm:$0xff] %v1582
                %v1584 = vld [vmem:[%s1418 + $0x290] sm:$0xff]
                %1585 = vst [vmem:[%s1419 + $0x510] sm:$0xff] %v1584
                %v1586 = vld [vmem:[%s1418 + $0x298] sm:$0xff]
                %1587 = vst [vmem:[%s1419 + $0x518] sm:$0xff] %v1586
                %v1588 = vld [vmem:[%s1418 + $0x2a0] sm:$0xff]
                %1589 = vst [vmem:[%s1419 + $0x520] sm:$0xff] %v1588
                %v1590 = vld [vmem:[%s1418 + $0x2a8] sm:$0xff]
                %1591 = vst [vmem:[%s1419 + $0x528] sm:$0xff] %v1590
                %v1592 = vld [vmem:[%s1418 + $0x2b0] sm:$0xff]
                %1593 = vst [vmem:[%s1419 + $0x530] sm:$0xff] %v1592
                %v1594 = vld [vmem:[%s1418 + $0x2b8] sm:$0xff]
                %1595 = vst [vmem:[%s1419 + $0x538] sm:$0xff] %v1594
                %v1596 = vld [vmem:[%s1418 + $0x2c0] sm:$0xff]
                %1597 = vst [vmem:[%s1419 + $0x580] sm:$0xff] %v1596
                %v1598 = vld [vmem:[%s1418 + $0x2c8] sm:$0xff]
                %1599 = vst [vmem:[%s1419 + $0x588] sm:$0xff] %v1598
                %v1600 = vld [vmem:[%s1418 + $0x2d0] sm:$0xff]
                %1601 = vst [vmem:[%s1419 + $0x590] sm:$0xff] %v1600
                %v1602 = vld [vmem:[%s1418 + $0x2d8] sm:$0xff]
                %1603 = vst [vmem:[%s1419 + $0x598] sm:$0xff] %v1602
                %v1604 = vld [vmem:[%s1418 + $0x2e0] sm:$0xff]
                %1605 = vst [vmem:[%s1419 + $0x5a0] sm:$0xff] %v1604
                %v1606 = vld [vmem:[%s1418 + $0x2e8] sm:$0xff]
                %1607 = vst [vmem:[%s1419 + $0x5a8] sm:$0xff] %v1606
                %v1608 = vld [vmem:[%s1418 + $0x2f0] sm:$0xff]
                %1609 = vst [vmem:[%s1419 + $0x5b0] sm:$0xff] %v1608
                %v1610 = vld [vmem:[%s1418 + $0x2f8] sm:$0xff]
                %1611 = vst [vmem:[%s1419 + $0x5b8] sm:$0xff] %v1610
                %v1612 = vld [vmem:[%s1418 + $0x300] sm:$0xff]
                %1613 = vst [vmem:[%s1419 + $0x600] sm:$0xff] %v1612
                %v1614 = vld [vmem:[%s1418 + $0x308] sm:$0xff]
                %1615 = vst [vmem:[%s1419 + $0x608] sm:$0xff] %v1614
                %v1616 = vld [vmem:[%s1418 + $0x310] sm:$0xff]
                %1617 = vst [vmem:[%s1419 + $0x610] sm:$0xff] %v1616
                %v1618 = vld [vmem:[%s1418 + $0x318] sm:$0xff]
                %1619 = vst [vmem:[%s1419 + $0x618] sm:$0xff] %v1618
                %v1620 = vld [vmem:[%s1418 + $0x320] sm:$0xff]
                %1621 = vst [vmem:[%s1419 + $0x620] sm:$0xff] %v1620
                %v1622 = vld [vmem:[%s1418 + $0x328] sm:$0xff]
                %1623 = vst [vmem:[%s1419 + $0x628] sm:$0xff] %v1622
                %v1624 = vld [vmem:[%s1418 + $0x330] sm:$0xff]
                %1625 = vst [vmem:[%s1419 + $0x630] sm:$0xff] %v1624
                %v1626 = vld [vmem:[%s1418 + $0x338] sm:$0xff]
                %1627 = vst [vmem:[%s1419 + $0x638] sm:$0xff] %v1626
                %v1628 = vld [vmem:[%s1418 + $0x340] sm:$0xff]
                %1629 = vst [vmem:[%s1419 + $0x680] sm:$0xff] %v1628
                %v1630 = vld [vmem:[%s1418 + $0x348] sm:$0xff]
                %1631 = vst [vmem:[%s1419 + $0x688] sm:$0xff] %v1630
                %v1632 = vld [vmem:[%s1418 + $0x350] sm:$0xff]
                %1633 = vst [vmem:[%s1419 + $0x690] sm:$0xff] %v1632
                %v1634 = vld [vmem:[%s1418 + $0x358] sm:$0xff]
                %1635 = vst [vmem:[%s1419 + $0x698] sm:$0xff] %v1634
                %v1636 = vld [vmem:[%s1418 + $0x360] sm:$0xff]
                %1637 = vst [vmem:[%s1419 + $0x6a0] sm:$0xff] %v1636
                %v1638 = vld [vmem:[%s1418 + $0x368] sm:$0xff]
                %1639 = vst [vmem:[%s1419 + $0x6a8] sm:$0xff] %v1638
                %v1640 = vld [vmem:[%s1418 + $0x370] sm:$0xff]
                %1641 = vst [vmem:[%s1419 + $0x6b0] sm:$0xff] %v1640
                %v1642 = vld [vmem:[%s1418 + $0x378] sm:$0xff]
                %1643 = vst [vmem:[%s1419 + $0x6b8] sm:$0xff] %v1642
                %v1644 = vld [vmem:[%s1418 + $0x380] sm:$0xff]
                %1645 = vst [vmem:[%s1419 + $0x700] sm:$0xff] %v1644
                %v1646 = vld [vmem:[%s1418 + $0x388] sm:$0xff]
                %1647 = vst [vmem:[%s1419 + $0x708] sm:$0xff] %v1646
                %v1648 = vld [vmem:[%s1418 + $0x390] sm:$0xff]
                %1649 = vst [vmem:[%s1419 + $0x710] sm:$0xff] %v1648
                %v1650 = vld [vmem:[%s1418 + $0x398] sm:$0xff]
                %1651 = vst [vmem:[%s1419 + $0x718] sm:$0xff] %v1650
                %v1652 = vld [vmem:[%s1418 + $0x3a0] sm:$0xff]
                %1653 = vst [vmem:[%s1419 + $0x720] sm:$0xff] %v1652
                %v1654 = vld [vmem:[%s1418 + $0x3a8] sm:$0xff]
                %1655 = vst [vmem:[%s1419 + $0x728] sm:$0xff] %v1654
                %v1656 = vld [vmem:[%s1418 + $0x3b0] sm:$0xff]
                %1657 = vst [vmem:[%s1419 + $0x730] sm:$0xff] %v1656
                %v1658 = vld [vmem:[%s1418 + $0x3b8] sm:$0xff]
                %1659 = vst [vmem:[%s1419 + $0x738] sm:$0xff] %v1658
                %v1660 = vld [vmem:[%s1418 + $0x3c0] sm:$0xff]
                %1661 = vst [vmem:[%s1419 + $0x780] sm:$0xff] %v1660
                %v1662 = vld [vmem:[%s1418 + $0x3c8] sm:$0xff]
                %1663 = vst [vmem:[%s1419 + $0x788] sm:$0xff] %v1662
                %v1664 = vld [vmem:[%s1418 + $0x3d0] sm:$0xff]
                %1665 = vst [vmem:[%s1419 + $0x790] sm:$0xff] %v1664
                %v1666 = vld [vmem:[%s1418 + $0x3d8] sm:$0xff]
                %1667 = vst [vmem:[%s1419 + $0x798] sm:$0xff] %v1666
                %v1668 = vld [vmem:[%s1418 + $0x3e0] sm:$0xff]
                %1669 = vst [vmem:[%s1419 + $0x7a0] sm:$0xff] %v1668
                %v1670 = vld [vmem:[%s1418 + $0x3e8] sm:$0xff]
                %1671 = vst [vmem:[%s1419 + $0x7a8] sm:$0xff] %v1670
                %v1672 = vld [vmem:[%s1418 + $0x3f0] sm:$0xff]
                %1673 = vst [vmem:[%s1419 + $0x7b0] sm:$0xff] %v1672
                %v1674 = vld [vmem:[%s1418 + $0x3f8] sm:$0xff]
                %1675 = vst [vmem:[%s1419 + $0x7b8] sm:$0xff] %v1674
              $region72: #{single_conv3d_block.1} parent=66 // loop_footer
                %s1417 = sadd.s32 1, %s1413
              $region73: #{single_conv3d_block.1} parent=66 // loop_footer_branch
                %1412 = sbr.rel target = $region69
              $region74: #{single_conv3d_block.1} parent=66 // loop_exit
                _
            $region67: #{single_conv3d_block.1} parent=62 // pred_fallthru
              _
            // Predicated region
            $region75: #{single_conv3d_block.1} parent=62 // pred_check
              _
            $region76: #{single_conv3d_block.1} parent=62 // pred_check_branch
              %1677 = sbr.rel target = $region78
            $region77: #{single_conv3d_block.1} parent=62 // pred_region
              _
            $region78: #{single_conv3d_block.1} parent=62 // pred_fallthru
              _
          $region63: #{single_conv3d_block.1} parent=58 // pred_fallthru
            _
          %1678 = vnop
        $region59: #{single_conv3d_block.1} parent=50 // pred_fallthru
          _
      $region51: #{single_conv3d_block.1} parent=5 // pred_fallthru
        _
      %p1679 = scmp.le.s32.totalorder 2, %s9
      // Predicated region
      $region79: #{single_conv3d_block.1} parent=5 // pred_check
        %p1680 = pneg %p1679
      $region80: #{single_conv3d_block.1} parent=5 // pred_check_branch
        %1682 = sbr.rel (%p1680) target = $region82
      $region81: #{single_conv3d_block.1} parent=5 // pred_region
        %s1683 = ssub.s32 %s9, 2
        // Predicated region
        $region83: #{single_conv3d_block.1} parent=81 // pred_check
          %p1684 = pneg %p136
        $region84: #{single_conv3d_block.1} parent=81 // pred_check_branch
          %1686 = sbr.rel (%p1684) target = $region86
        $region85: #{single_conv3d_block.1} parent=81 // pred_region
          %s1687 = sand.u32 %s121, 1
          %s1688 = sand.u32 %s121, 1
          %s1689 = smul.addr %s1688, 1024
          %s1690 = scalar_lea.vmem [#allocation3], %s1689
        $region86: #{single_conv3d_block.1} parent=81 // pred_fallthru
          _
      $region82: #{single_conv3d_block.1} parent=5 // pred_fallthru
        _
    $region6: #{single_conv3d_block.1} parent=1 // loop_footer
      %s13 = sadd.s32 1, %s9
    $region7: #{single_conv3d_block.1} parent=1 // loop_footer_branch
      %8 = sbr.rel target = $region3
    $region8: #{single_conv3d_block.1} parent=1 // loop_exit
      _

</llo_original>
